<compile_context>
chip_gen: v7x
topology: tpu7x:2x2x1
jax: 0.10.0
libtpu: 0.0.40
codegen_flags: <defaults>
</compile_context>

<pallas_src>
import math

import numpy as np
import jax
import jax.numpy as jnp
from jax import lax
from jax.experimental import pallas as pl
from jax.experimental.pallas import tpu as pltpu


# ----------------------------------------------------------------------------
# Static wavefront geometry (uniform across the three LSTM stacks)
# ----------------------------------------------------------------------------
SW = 16                       # slot lane width  (= max hidden size, stack 3)
NSLOT = 8                     # layers per wavefront group
GW = NSLOT * SW               # 128: lane width of h / c / each gate group
KDIM = 2 * GW + NSLOT         # 264: [h | layer-input | ones(bias)] rows
NDIM = 4 * GW                 # 512: [i | f | o | g] gate-major columns

STACKS = (("l1", 4, 32), ("l2", 8, 64), ("l3", 16, 64))   # (name, hidden, layers)
NGROUPS = sum(L // NSLOT for _, _, L in STACKS)            # 4 + 8 + 8 = 20
STACK_END = tuple(int(v) - 1 for v in np.cumsum([L // NSLOT for _, _, L in STACKS]))
# -> (3, 11, 19): last group index of each stack (ReLU boundaries / final FC)


# ----------------------------------------------------------------------------
# Pallas kernel
# ----------------------------------------------------------------------------
def make_dqn_kernel(T, Bp):
    relu_a, relu_b, last_group = STACK_END

    def kernel(x_ref, w_ref, wfc_ref, bfc_ref, out_ref, y_ref):
        p = pl.program_id(0)

        # Group 0 of stack 1: seed the boundary-activation scratch with the input.
        @pl.when(p == 0)
        def _():
            y_ref[...] = x_ref[...]

        lane = lax.broadcasted_iota(jnp.int32, (Bp, GW), 1)
        ones_k = jnp.ones((Bp, NSLOT), jnp.float32)

        def step(gs, carry):
            h, c = carry
            # Reset the slot entering at this wavefront step (and not-yet-entered
            # slots) to the LSTM zero initial state.  Exact no-op in the drain.
            thr = jnp.minimum(gs, NSLOT) * SW
            keep = lane < thr
            h = jnp.where(keep, h, 0.0)
            c = jnp.where(keep, c, 0.0)

            # Slot k consumes slot k-1's output from the previous step; slot 0
            # consumes the previous layer-group's output y_ref[t] during the fill.
            y_in = y_ref[jnp.minimum(gs, T - 1)]                    # (Bp, SW)
            head = jnp.where(gs < T, y_in, h[:, GW - SW:])
            inp = jnp.concatenate([head, h[:, :GW - SW]], axis=1)   # (Bp, GW)

            # One block-diagonal matmul computes all 8 slots' gates; the trailing
            # ones lanes pick up the bias rows folded into the weight matrix.
            z = jnp.concatenate([h, inp, ones_k], axis=1)           # (Bp, KDIM)
            g = jnp.dot(z, w_ref[0], preferred_element_type=jnp.float32)  # (Bp, NDIM)

            # Gate-major layout: [i | f | o] sigmoid slab, [g] tanh slab.
            s3 = jax.nn.sigmoid(g[:, :3 * GW])
            gg = jnp.tanh(g[:, 3 * GW:])
            c = s3[:, GW:2 * GW] * c + s3[:, :GW] * gg
            h = s3[:, 2 * GW:3 * GW] * jnp.tanh(c)

            # Slot 7 (last layer of the group) streams its outputs back into y_ref.
            # During the fill this harmlessly overwrites y_ref[0], which is only
            # read at gs == 0 (before this store).
            y_ref[jnp.maximum(gs - (T - 1), 0)] = h[:, GW - SW:]
            return h, c

        zero = jnp.zeros((Bp, GW), jnp.float32)
        lax.fori_loop(0, NSLOT + T - 1, step, (zero, zero))

        # Inter-stack ReLU on the boundary activations.
        @pl.when((p == relu_a) | (p == relu_b))
        def _():
            y_ref[...] = jnp.maximum(y_ref[...], 0.0)

        # Final ReLU + Linear(16 -> 4), fused into the last group of stack 3.
        @pl.when(p == last_group)
        def _():
            w_fc = wfc_ref[...]
            b_fc = bfc_ref[...]
            for t in range(T):                       # runs once, tiny
                y_t = jnp.maximum(y_ref[t], 0.0)     # (Bp, SW)
                out_ref[t * Bp:(t + 1) * Bp, :] = (
                    jnp.dot(y_t, w_fc, preferred_element_type=jnp.float32) + b_fc)

    return kernel


# ----------------------------------------------------------------------------
# Host-side parameter construction & block-diagonal wavefront packing
# ----------------------------------------------------------------------------
def init_lstm_stack(key, input_size, hidden, num_layers):
    layers = []
    k = 1.0 / math.sqrt(hidden)
    for l in range(num_layers):
        in_sz = input_size if l == 0 else hidden
        key, k0, k1, k2, k3 = jax.random.split(key, 5)
        layers.append(dict(
            w_ih=jax.random.uniform(k0, (4 * hidden, in_sz), jnp.float32, -k, k),
            w_hh=jax.random.uniform(k1, (4 * hidden, hidden), jnp.float32, -k, k),
            b_ih=jax.random.uniform(k2, (4 * hidden,), jnp.float32, -k, k),
            b_hh=jax.random.uniform(k3, (4 * hidden,), jnp.float32, -k, k)))
    return key, layers


def pack_stack_groups(layers, hidden):
    """Pack one nn.LSTM stack into per-group block-diagonal wavefront weights.

    Output shape (L // 8, KDIM, NDIM).  Row layout: [h lanes | input lanes | bias
    rows]; column layout gate-major (i | f | o | g), slot k at lanes [k*SW, k*SW+H).
    """
    L = len(layers)
    assert L % NSLOT == 0
    H = hidden
    src_gate = (0, 1, 3, 2)        # target (i, f, o, g)  <-  PyTorch (i, f, g, o)
    out = np.zeros((L // NSLOT, KDIM, NDIM), np.float32)
    for l in range(L):
        grp, k = divmod(l, NSLOT)
        w_ih = np.asarray(layers[l]["w_ih"], np.float32)    # (4H, In)
        w_hh = np.asarray(layers[l]["w_hh"], np.float32)    # (4H, H)
        bias = np.asarray(layers[l]["b_ih"] + layers[l]["b_hh"], np.float32)
        in_sz = w_ih.shape[1]
        for j, sj in enumerate(src_gate):
            rows = slice(sj * H, (sj + 1) * H)
            c0 = j * GW + k * SW
            out[grp, k * SW:k * SW + H, c0:c0 + H] = w_hh[rows].T
            out[grp, GW + k * SW:GW + k * SW + in_sz, c0:c0 + H] = w_ih[rows].T
            out[grp, 2 * GW + k, c0:c0 + H] = bias[rows]
    return out


def pack_dqn_params(params):
    groups = [pack_stack_groups(params[name], hidden) for name, hidden, _ in STACKS]
    return dict(
        w_groups=jnp.asarray(np.concatenate(groups, axis=0)),   # (NGROUPS, KDIM, NDIM)
        fc_w_t=jnp.asarray(params["fc_w"]).T,                   # (16, 4)
        fc_b=jnp.asarray(params["fc_b"])[None, :],              # (1, 4)
    )


# ----------------------------------------------------------------------------
# Wrapper around pallas_call
# ----------------------------------------------------------------------------
def dqn_forward_pallas(x, packed):
    T, B, F = x.shape                     # PyTorch nn.LSTM default (seq, batch, feat)
    Bp = 8                                # pad batch to one full sublane group
    assert B <= Bp and F <= SW
    x_p = jnp.zeros((T, Bp, SW), jnp.float32).at[:, :B, :F].set(x.astype(jnp.float32))

    out2d = pl.pallas_call(
        make_dqn_kernel(T, Bp),
        out_shape=jax.ShapeDtypeStruct((T * Bp, 4), jnp.float32),
        grid=(NGROUPS,),
        in_specs=[
            pl.BlockSpec((T, Bp, SW), lambda p: (0, 0, 0)),       # input (resident)
            pl.BlockSpec((1, KDIM, NDIM), lambda p: (p, 0, 0)),   # group weights (pipelined)
            pl.BlockSpec((SW, 4), lambda p: (0, 0)),              # fc weight^T
            pl.BlockSpec((1, 4), lambda p: (0, 0)),               # fc bias
        ],
        out_specs=pl.BlockSpec((T * Bp, 4), lambda p: (0, 0)),
        scratch_shapes=[pltpu.VMEM((T, Bp, SW), jnp.float32)],    # boundary activations
        compiler_params=pltpu.CompilerParams(
            dimension_semantics=("arbitrary",)),
    )(x_p, packed["w_groups"], packed["fc_w_t"], packed["fc_b"])
    return out2d.reshape(T, Bp, 4)[:, :B, :]


# ----------------------------------------------------------------------------
# Pure-JAX reference (mirrors torch.nn.LSTM semantics) for validation
# ----------------------------------------------------------------------------
def lstm_layer_ref(x_seq, w_ih, w_hh, b):
    H = w_hh.shape[1]
    B = x_seq.shape[1]

    def step(carry, x_t):
        h, c = carry
        g = x_t @ w_ih.T + h @ w_hh.T + b
        i = jax.nn.sigmoid(g[:, 0 * H:1 * H])
        f = jax.nn.sigmoid(g[:, 1 * H:2 * H])
        gg = jnp.tanh(g[:, 2 * H:3 * H])
        o = jax.nn.sigmoid(g[:, 3 * H:4 * H])
        c = f * c + i * gg
        h = o * jnp.tanh(c)
        return (h, c), h

    init = (jnp.zeros((B, H), jnp.float32), jnp.zeros((B, H), jnp.float32))
    _, ys = lax.scan(step, init, x_seq)
    return ys


def lstm_stack_ref(x_seq, layers):
    y = lstm_layer_ref(x_seq, layers[0]['w_ih'], layers[0]['w_hh'],
                       layers[0]['b_ih'] + layers[0]['b_hh'])
    if len(layers) > 1:
        wih = jnp.stack([p['w_ih'] for p in layers[1:]])
        whh = jnp.stack([p['w_hh'] for p in layers[1:]])
        b = jnp.stack([p['b_ih'] + p['b_hh'] for p in layers[1:]])

        def body(seq, lp):
            return lstm_layer_ref(seq, lp[0], lp[1], lp[2]), None

        y, _ = lax.scan(body, y, (wih, whh, b))
    return y


def dqn_ref(x, params):
    y = lstm_stack_ref(x, params['l1'])
    y = jnp.maximum(y, 0.0)
    y = lstm_stack_ref(y, params['l2'])
    y = jnp.maximum(y, 0.0)
    y = lstm_stack_ref(y, params['l3'])
    y = jnp.maximum(y, 0.0)
    return y @ params['fc_w'].T + params['fc_b']


# ----------------------------------------------------------------------------
if __name__ == "__main__":
    key = jax.random.PRNGKey(0)

    # Parameters (shapes dictated by the PyTorch module __init__).
    key, l1 = init_lstm_stack(key, input_size=2, hidden=4, num_layers=32)
    key, l2 = init_lstm_stack(key, input_size=4, hidden=8, num_layers=64)
    key, l3 = init_lstm_stack(key, input_size=8, hidden=16, num_layers=64)
    key, kfw, kfb, kx = jax.random.split(key, 4)
    kfc = 1.0 / math.sqrt(16)
    params = dict(
        l1=l1, l2=l2, l3=l3,
        fc_w=jax.random.uniform(kfw, (4, 16), jnp.float32, -kfc, kfc),
        fc_b=jax.random.uniform(kfb, (4,), jnp.float32, -kfc, kfc),
    )
    packed = pack_dqn_params(params)

    # Example input: (seq=8, batch=2, features=2), PyTorch (T, B, F) convention.
    T, B = 8, 2
    x = jax.random.normal(kx, (T, B, 2), jnp.float32)

    fwd = jax.jit(dqn_forward_pallas)
    out = jax.block_until_ready(fwd(x, packed))
    assert out.shape == (T, B, 4) and out.dtype == jnp.float32

    ref = jax.block_until_ready(jax.jit(dqn_ref)(x, params))
    assert jnp.allclose(out, ref, atol=2e-3, rtol=2e-3), (
        f"mismatch: max abs err {jnp.max(jnp.abs(out - ref))}")

    print("KERNEL_OK")
</pallas_src>

<mosaic_0001>
module attributes {stable_mosaic.version = 11 : i64} {
  func.func @kernel(%arg0: i32, %arg1: memref<8x8x16xf32, #tpu.memory_space<vmem>>, %arg2: memref<1x264x512xf32, #tpu.memory_space<vmem>>, %arg3: memref<16x4xf32, #tpu.memory_space<vmem>>, %arg4: memref<1x4xf32, #tpu.memory_space<vmem>>, %arg5: memref<64x4xf32, #tpu.memory_space<vmem>>, %arg6: memref<8x8x16xf32, #tpu.memory_space<vmem>>) attributes {dimension_semantics = [#tpu.dimension_semantics<arbitrary>], iteration_bounds = array<i64: 20>, scalar_prefetch = 0 : i64, scratch_operands = 1 : i64, tpu.core_type = #tpu.core_type<tc>, window_params = [{pipeline_mode = #tpu.pipeline_mode<synchronous>, transform_indices = @transform_0, window_bounds = array<i64: 8, 8, 16>}, {transform_indices = @transform_1, window_bounds = array<i64: 1, 264, 512>}, {pipeline_mode = #tpu.pipeline_mode<synchronous>, transform_indices = @transform_2, window_bounds = array<i64: 16, 4>}, {pipeline_mode = #tpu.pipeline_mode<synchronous>, transform_indices = @transform_3, window_bounds = array<i64: 1, 4>}, {pipeline_mode = #tpu.pipeline_mode<synchronous>, transform_indices = @transform_4, window_bounds = array<i64: 64, 4>}]} {
    %c0_i32 = arith.constant 0 : i32
    %0 = arith.cmpi eq, %arg0, %c0_i32 : i32
    %1 = arith.extui %0 : i1 to i32
    %c0_i32_0 = arith.constant 0 : i32
    %2 = arith.cmpi ne, %1, %c0_i32_0 : i32
    scf.if %2 {
      %c0 = arith.constant 0 : index
      %c0_6 = arith.constant 0 : index
      %c0_7 = arith.constant 0 : index
      %16 = vector.load %arg1[%c0, %c0_6, %c0_7] : memref<8x8x16xf32, #tpu.memory_space<vmem>>, vector<8x8x16xf32>
      %c0_8 = arith.constant 0 : index
      %c0_9 = arith.constant 0 : index
      %c0_10 = arith.constant 0 : index
      %17 = vector.load %arg6[%c0_8, %c0_9, %c0_10] : memref<8x8x16xf32, #tpu.memory_space<vmem>>, vector<8x8x16xf32>
      tpu.vector_store %arg6[%c0_8, %c0_9, %c0_10], %16 {strides = array<i32>} : memref<8x8x16xf32, #tpu.memory_space<vmem>>, vector<8x8x16xf32>,
    } else {
    }
    %3 = tpu.iota {dimensions = array<i32: 1>} : vector<8x128xi32>
    %cst = arith.constant 1.000000e+00 : f32
    %4 = vector.broadcast %cst : f32 to vector<8x8xf32>
    %cst_1 = arith.constant 0.000000e+00 : f32
    %5 = vector.broadcast %cst_1 : f32 to vector<8x128xf32>
    %c0_i32_2 = arith.constant 0 : i32
    %c15_i32 = arith.constant 15 : i32
    %6 = arith.addi %c0_i32_2, %c15_i32 : i32
    %c1_i32 = arith.constant 1 : i32
    %7:2 = scf.for %arg7 = %c0_i32_2 to %6 step %c1_i32 iter_args(%arg8 = %5, %arg9 = %5) -> (vector<8x128xf32>, vector<8x128xf32>)  : i32 {
      %c8_i32 = arith.constant 8 : i32
      %16 = arith.minsi %arg7, %c8_i32 : i32
      %c16_i32 = arith.constant 16 : i32
      %17 = arith.muli %16, %c16_i32 : i32
      %18 = vector.broadcast %17 : i32 to vector<8x128xi32>
      %19 = arith.cmpi slt, %3, %18 : vector<8x128xi32>
      %cst_6 = arith.constant 0.000000e+00 : f32
      %20 = vector.broadcast %cst_6 : f32 to vector<8x128xf32>
      %21 = arith.select %19, %arg8, %20 : vector<8x128xi1>, vector<8x128xf32>
      %cst_7 = arith.constant 0.000000e+00 : f32
      %22 = vector.broadcast %cst_7 : f32 to vector<8x128xf32>
      %23 = arith.select %19, %arg9, %22 : vector<8x128xi1>, vector<8x128xf32>
      %c7_i32 = arith.constant 7 : i32
      %24 = arith.minsi %arg7, %c7_i32 : i32
      %25 = arith.index_cast %24 : i32 to index
      %c0 = arith.constant 0 : index
      %c0_8 = arith.constant 0 : index
      %26 = vector.load %arg6[%25, %c0, %c0_8] : memref<8x8x16xf32, #tpu.memory_space<vmem>>, vector<1x8x16xf32>
      %27 = vector.shape_cast %26 : vector<1x8x16xf32> to vector<8x16xf32>
      %c8_i32_9 = arith.constant 8 : i32
      %28 = arith.cmpi slt, %arg7, %c8_i32_9 : i32
      %29 = vector.extract_strided_slice %21 {offsets = [0, 112], sizes = [8, 16], strides = [1, 1]} : vector<8x128xf32> to vector<8x16xf32>
      %30 = arith.select %28, %27, %29 : vector<8x16xf32>
      %31 = vector.extract_strided_slice %21 {offsets = [0, 0], sizes = [8, 112], strides = [1, 1]} : vector<8x128xf32> to vector<8x112xf32>
      %32 = tpu.concatenate %30, %31 in 1 : vector<8x16xf32>, vector<8x112xf32> -> vector<8x128xf32>
      %33 = tpu.concatenate %21, %32, %4 in 1 : vector<8x128xf32>, vector<8x128xf32>, vector<8x8xf32> -> vector<8x264xf32>
      %c0_10 = arith.constant 0 : index
      %c0_11 = arith.constant 0 : index
      %c0_12 = arith.constant 0 : index
      %34 = vector.load %arg2[%c0_10, %c0_11, %c0_12] : memref<1x264x512xf32, #tpu.memory_space<vmem>>, vector<1x264x512xf32>
      %35 = vector.shape_cast %34 : vector<1x264x512xf32> to vector<264x512xf32>
      %cst_13 = arith.constant dense<0.000000e+00> : vector<8x512xf32>
      %36 = tpu.matmul %33, %35, %cst_13 {dimension_numbers = #tpu.dot_dimension_numbers<[1], [0], [0], [1], [0, 0, 1, 1], [], []>} : vector<8x264xf32>, vector<264x512xf32>, vector<8x512xf32> -> vector<8x512xf32>
      %37 = vector.extract_strided_slice %36 {offsets = [0, 0], sizes = [8, 384], strides = [1, 1]} : vector<8x512xf32> to vector<8x384xf32>
      %38 = arith.negf %37 : vector<8x384xf32>
      %39 = math.exp %38 : vector<8x384xf32>
      %cst_14 = arith.constant 1.000000e+00 : f32
      %40 = vector.broadcast %cst_14 : f32 to vector<8x384xf32>
      %41 = arith.addf %40, %39 : vector<8x384xf32>
      %42 = arith.divf %40, %41 : vector<8x384xf32>
      %43 = vector.extract_strided_slice %36 {offsets = [0, 384], sizes = [8, 128], strides = [1, 1]} : vector<8x512xf32> to vector<8x128xf32>
      %44 = math.tanh %43 : vector<8x128xf32>
      %45 = vector.extract_strided_slice %42 {offsets = [0, 128], sizes = [8, 128], strides = [1, 1]} : vector<8x384xf32> to vector<8x128xf32>
      %46 = arith.mulf %45, %23 : vector<8x128xf32>
      %47 = vector.extract_strided_slice %42 {offsets = [0, 0], sizes = [8, 128], strides = [1, 1]} : vector<8x384xf32> to vector<8x128xf32>
      %48 = arith.mulf %47, %44 : vector<8x128xf32>
      %49 = arith.addf %46, %48 : vector<8x128xf32>
      %50 = vector.extract_strided_slice %42 {offsets = [0, 256], sizes = [8, 128], strides = [1, 1]} : vector<8x384xf32> to vector<8x128xf32>
      %51 = math.tanh %49 : vector<8x128xf32>
      %52 = arith.mulf %50, %51 : vector<8x128xf32>
      %53 = vector.extract_strided_slice %52 {offsets = [0, 112], sizes = [8, 16], strides = [1, 1]} : vector<8x128xf32> to vector<8x16xf32>
      %c7_i32_15 = arith.constant 7 : i32
      %54 = arith.subi %arg7, %c7_i32_15 : i32
      %c0_i32_16 = arith.constant 0 : i32
      %55 = arith.maxsi %54, %c0_i32_16 : i32
      %56 = arith.index_cast %55 : i32 to index
      %c0_17 = arith.constant 0 : index
      %c0_18 = arith.constant 0 : index
      %57 = vector.load %arg6[%56, %c0_17, %c0_18] : memref<8x8x16xf32, #tpu.memory_space<vmem>>, vector<1x8x16xf32>
      %58 = vector.shape_cast %57 : vector<1x8x16xf32> to vector<8x16xf32>
      %59 = vector.shape_cast %53 : vector<8x16xf32> to vector<1x8x16xf32>
      tpu.vector_store %arg6[%56, %c0_17, %c0_18], %59 {strides = array<i32>} : memref<8x8x16xf32, #tpu.memory_space<vmem>>, vector<1x8x16xf32>,
      scf.yield %52, %49 : vector<8x128xf32>, vector<8x128xf32>
    }
    %c15_i32_3 = arith.constant 15 : i32
    %c3_i32 = arith.constant 3 : i32
    %8 = arith.cmpi eq, %arg0, %c3_i32 : i32
    %c11_i32 = arith.constant 11 : i32
    %9 = arith.cmpi eq, %arg0, %c11_i32 : i32
    %10 = arith.ori %8, %9 : i1
    %11 = arith.extui %10 : i1 to i32
    %c0_i32_4 = arith.constant 0 : i32
    %12 = arith.cmpi ne, %11, %c0_i32_4 : i32
    scf.if %12 {
      %c0 = arith.constant 0 : index
      %c0_6 = arith.constant 0 : index
      %c0_7 = arith.constant 0 : index
      %16 = vector.load %arg6[%c0, %c0_6, %c0_7] : memref<8x8x16xf32, #tpu.memory_space<vmem>>, vector<8x8x16xf32>
      %cst_8 = arith.constant 0.000000e+00 : f32
      %17 = vector.broadcast %cst_8 : f32 to vector<8x8x16xf32>
      %18 = arith.maximumf %16, %17 : vector<8x8x16xf32>
      %c0_9 = arith.constant 0 : index
      %c0_10 = arith.constant 0 : index
      %c0_11 = arith.constant 0 : index
      %19 = vector.load %arg6[%c0_9, %c0_10, %c0_11] : memref<8x8x16xf32, #tpu.memory_space<vmem>>, vector<8x8x16xf32>
      tpu.vector_store %arg6[%c0_9, %c0_10, %c0_11], %18 {strides = array<i32>} : memref<8x8x16xf32, #tpu.memory_space<vmem>>, vector<8x8x16xf32>,
    } else {
    }
    %c19_i32 = arith.constant 19 : i32
    %13 = arith.cmpi eq, %arg0, %c19_i32 : i32
    %14 = arith.extui %13 : i1 to i32
    %c0_i32_5 = arith.constant 0 : i32
    %15 = arith.cmpi ne, %14, %c0_i32_5 : i32
    scf.if %15 {
      %c0 = arith.constant 0 : index
      %c0_6 = arith.constant 0 : index
      %16 = vector.load %arg3[%c0, %c0_6] : memref<16x4xf32, #tpu.memory_space<vmem>>, vector<16x4xf32>
      %c0_7 = arith.constant 0 : index
      %c0_8 = arith.constant 0 : index
      %17 = vector.load %arg4[%c0_7, %c0_8] : memref<1x4xf32, #tpu.memory_space<vmem>>, vector<1x4xf32>
      %c0_9 = arith.constant 0 : index
      %c0_10 = arith.constant 0 : index
      %c0_11 = arith.constant 0 : index
      %18 = vector.load %arg6[%c0_9, %c0_10, %c0_11] : memref<8x8x16xf32, #tpu.memory_space<vmem>>, vector<1x8x16xf32>
      %19 = vector.shape_cast %18 : vector<1x8x16xf32> to vector<8x16xf32>
      %cst_12 = arith.constant 0.000000e+00 : f32
      %20 = vector.broadcast %cst_12 : f32 to vector<8x16xf32>
      %21 = arith.maximumf %19, %20 : vector<8x16xf32>
      %cst_13 = arith.constant dense<0.000000e+00> : vector<8x4xf32>
      %22 = tpu.matmul %21, %16, %cst_13 {dimension_numbers = #tpu.dot_dimension_numbers<[1], [0], [0], [1], [0, 0, 1, 1], [], []>} : vector<8x16xf32>, vector<16x4xf32>, vector<8x4xf32> -> vector<8x4xf32>
      %23 = vector.broadcast %17 : vector<1x4xf32> to vector<8x4xf32>
      %24 = arith.addf %22, %23 : vector<8x4xf32>
      %c0_14 = arith.constant 0 : index
      %c0_15 = arith.constant 0 : index
      %25 = vector.load %arg5[%c0_14, %c0_15] : memref<64x4xf32, #tpu.memory_space<vmem>>, vector<8x4xf32>
      tpu.vector_store %arg5[%c0_14, %c0_15], %24 {strides = array<i32>} : memref<64x4xf32, #tpu.memory_space<vmem>>, vector<8x4xf32>,
      %c1 = arith.constant 1 : index
      %c0_16 = arith.constant 0 : index
      %c0_17 = arith.constant 0 : index
      %26 = vector.load %arg6[%c1, %c0_16, %c0_17] : memref<8x8x16xf32, #tpu.memory_space<vmem>>, vector<1x8x16xf32>
      %27 = vector.shape_cast %26 : vector<1x8x16xf32> to vector<8x16xf32>
      %cst_18 = arith.constant 0.000000e+00 : f32
      %28 = vector.broadcast %cst_18 : f32 to vector<8x16xf32>
      %29 = arith.maximumf %27, %28 : vector<8x16xf32>
      %cst_19 = arith.constant dense<0.000000e+00> : vector<8x4xf32>
      %30 = tpu.matmul %29, %16, %cst_19 {dimension_numbers = #tpu.dot_dimension_numbers<[1], [0], [0], [1], [0, 0, 1, 1], [], []>} : vector<8x16xf32>, vector<16x4xf32>, vector<8x4xf32> -> vector<8x4xf32>
      %31 = vector.broadcast %17 : vector<1x4xf32> to vector<8x4xf32>
      %32 = arith.addf %30, %31 : vector<8x4xf32>
      %c8 = arith.constant 8 : index
      %c0_20 = arith.constant 0 : index
      %33 = vector.load %arg5[%c8, %c0_20] : memref<64x4xf32, #tpu.memory_space<vmem>>, vector<8x4xf32>
      tpu.vector_store %arg5[%c8, %c0_20], %32 {strides = array<i32>} : memref<64x4xf32, #tpu.memory_space<vmem>>, vector<8x4xf32>,
      %c2 = arith.constant 2 : index
      %c0_21 = arith.constant 0 : index
      %c0_22 = arith.constant 0 : index
      %34 = vector.load %arg6[%c2, %c0_21, %c0_22] : memref<8x8x16xf32, #tpu.memory_space<vmem>>, vector<1x8x16xf32>
      %35 = vector.shape_cast %34 : vector<1x8x16xf32> to vector<8x16xf32>
      %cst_23 = arith.constant 0.000000e+00 : f32
      %36 = vector.broadcast %cst_23 : f32 to vector<8x16xf32>
      %37 = arith.maximumf %35, %36 : vector<8x16xf32>
      %cst_24 = arith.constant dense<0.000000e+00> : vector<8x4xf32>
      %38 = tpu.matmul %37, %16, %cst_24 {dimension_numbers = #tpu.dot_dimension_numbers<[1], [0], [0], [1], [0, 0, 1, 1], [], []>} : vector<8x16xf32>, vector<16x4xf32>, vector<8x4xf32> -> vector<8x4xf32>
      %39 = vector.broadcast %17 : vector<1x4xf32> to vector<8x4xf32>
      %40 = arith.addf %38, %39 : vector<8x4xf32>
      %c16 = arith.constant 16 : index
      %c0_25 = arith.constant 0 : index
      %41 = vector.load %arg5[%c16, %c0_25] : memref<64x4xf32, #tpu.memory_space<vmem>>, vector<8x4xf32>
      tpu.vector_store %arg5[%c16, %c0_25], %40 {strides = array<i32>} : memref<64x4xf32, #tpu.memory_space<vmem>>, vector<8x4xf32>,
      %c3 = arith.constant 3 : index
      %c0_26 = arith.constant 0 : index
      %c0_27 = arith.constant 0 : index
      %42 = vector.load %arg6[%c3, %c0_26, %c0_27] : memref<8x8x16xf32, #tpu.memory_space<vmem>>, vector<1x8x16xf32>
      %43 = vector.shape_cast %42 : vector<1x8x16xf32> to vector<8x16xf32>
      %cst_28 = arith.constant 0.000000e+00 : f32
      %44 = vector.broadcast %cst_28 : f32 to vector<8x16xf32>
      %45 = arith.maximumf %43, %44 : vector<8x16xf32>
      %cst_29 = arith.constant dense<0.000000e+00> : vector<8x4xf32>
      %46 = tpu.matmul %45, %16, %cst_29 {dimension_numbers = #tpu.dot_dimension_numbers<[1], [0], [0], [1], [0, 0, 1, 1], [], []>} : vector<8x16xf32>, vector<16x4xf32>, vector<8x4xf32> -> vector<8x4xf32>
      %47 = vector.broadcast %17 : vector<1x4xf32> to vector<8x4xf32>
      %48 = arith.addf %46, %47 : vector<8x4xf32>
      %c24 = arith.constant 24 : index
      %c0_30 = arith.constant 0 : index
      %49 = vector.load %arg5[%c24, %c0_30] : memref<64x4xf32, #tpu.memory_space<vmem>>, vector<8x4xf32>
      tpu.vector_store %arg5[%c24, %c0_30], %48 {strides = array<i32>} : memref<64x4xf32, #tpu.memory_space<vmem>>, vector<8x4xf32>,
      %c4 = arith.constant 4 : index
      %c0_31 = arith.constant 0 : index
      %c0_32 = arith.constant 0 : index
      %50 = vector.load %arg6[%c4, %c0_31, %c0_32] : memref<8x8x16xf32, #tpu.memory_space<vmem>>, vector<1x8x16xf32>
      %51 = vector.shape_cast %50 : vector<1x8x16xf32> to vector<8x16xf32>
      %cst_33 = arith.constant 0.000000e+00 : f32
      %52 = vector.broadcast %cst_33 : f32 to vector<8x16xf32>
      %53 = arith.maximumf %51, %52 : vector<8x16xf32>
      %cst_34 = arith.constant dense<0.000000e+00> : vector<8x4xf32>
      %54 = tpu.matmul %53, %16, %cst_34 {dimension_numbers = #tpu.dot_dimension_numbers<[1], [0], [0], [1], [0, 0, 1, 1], [], []>} : vector<8x16xf32>, vector<16x4xf32>, vector<8x4xf32> -> vector<8x4xf32>
      %55 = vector.broadcast %17 : vector<1x4xf32> to vector<8x4xf32>
      %56 = arith.addf %54, %55 : vector<8x4xf32>
      %c32 = arith.constant 32 : index
      %c0_35 = arith.constant 0 : index
      %57 = vector.load %arg5[%c32, %c0_35] : memref<64x4xf32, #tpu.memory_space<vmem>>, vector<8x4xf32>
      tpu.vector_store %arg5[%c32, %c0_35], %56 {strides = array<i32>} : memref<64x4xf32, #tpu.memory_space<vmem>>, vector<8x4xf32>,
      %c5 = arith.constant 5 : index
      %c0_36 = arith.constant 0 : index
      %c0_37 = arith.constant 0 : index
      %58 = vector.load %arg6[%c5, %c0_36, %c0_37] : memref<8x8x16xf32, #tpu.memory_space<vmem>>, vector<1x8x16xf32>
      %59 = vector.shape_cast %58 : vector<1x8x16xf32> to vector<8x16xf32>
      %cst_38 = arith.constant 0.000000e+00 : f32
      %60 = vector.broadcast %cst_38 : f32 to vector<8x16xf32>
      %61 = arith.maximumf %59, %60 : vector<8x16xf32>
      %cst_39 = arith.constant dense<0.000000e+00> : vector<8x4xf32>
      %62 = tpu.matmul %61, %16, %cst_39 {dimension_numbers = #tpu.dot_dimension_numbers<[1], [0], [0], [1], [0, 0, 1, 1], [], []>} : vector<8x16xf32>, vector<16x4xf32>, vector<8x4xf32> -> vector<8x4xf32>
      %63 = vector.broadcast %17 : vector<1x4xf32> to vector<8x4xf32>
      %64 = arith.addf %62, %63 : vector<8x4xf32>
      %c40 = arith.constant 40 : index
      %c0_40 = arith.constant 0 : index
      %65 = vector.load %arg5[%c40, %c0_40] : memref<64x4xf32, #tpu.memory_space<vmem>>, vector<8x4xf32>
      tpu.vector_store %arg5[%c40, %c0_40], %64 {strides = array<i32>} : memref<64x4xf32, #tpu.memory_space<vmem>>, vector<8x4xf32>,
      %c6 = arith.constant 6 : index
      %c0_41 = arith.constant 0 : index
      %c0_42 = arith.constant 0 : index
      %66 = vector.load %arg6[%c6, %c0_41, %c0_42] : memref<8x8x16xf32, #tpu.memory_space<vmem>>, vector<1x8x16xf32>
      %67 = vector.shape_cast %66 : vector<1x8x16xf32> to vector<8x16xf32>
      %cst_43 = arith.constant 0.000000e+00 : f32
      %68 = vector.broadcast %cst_43 : f32 to vector<8x16xf32>
      %69 = arith.maximumf %67, %68 : vector<8x16xf32>
      %cst_44 = arith.constant dense<0.000000e+00> : vector<8x4xf32>
      %70 = tpu.matmul %69, %16, %cst_44 {dimension_numbers = #tpu.dot_dimension_numbers<[1], [0], [0], [1], [0, 0, 1, 1], [], []>} : vector<8x16xf32>, vector<16x4xf32>, vector<8x4xf32> -> vector<8x4xf32>
      %71 = vector.broadcast %17 : vector<1x4xf32> to vector<8x4xf32>
      %72 = arith.addf %70, %71 : vector<8x4xf32>
      %c48 = arith.constant 48 : index
      %c0_45 = arith.constant 0 : index
      %73 = vector.load %arg5[%c48, %c0_45] : memref<64x4xf32, #tpu.memory_space<vmem>>, vector<8x4xf32>
      tpu.vector_store %arg5[%c48, %c0_45], %72 {strides = array<i32>} : memref<64x4xf32, #tpu.memory_space<vmem>>, vector<8x4xf32>,
      %c7 = arith.constant 7 : index
      %c0_46 = arith.constant 0 : index
      %c0_47 = arith.constant 0 : index
      %74 = vector.load %arg6[%c7, %c0_46, %c0_47] : memref<8x8x16xf32, #tpu.memory_space<vmem>>, vector<1x8x16xf32>
      %75 = vector.shape_cast %74 : vector<1x8x16xf32> to vector<8x16xf32>
      %cst_48 = arith.constant 0.000000e+00 : f32
      %76 = vector.broadcast %cst_48 : f32 to vector<8x16xf32>
      %77 = arith.maximumf %75, %76 : vector<8x16xf32>
      %cst_49 = arith.constant dense<0.000000e+00> : vector<8x4xf32>
      %78 = tpu.matmul %77, %16, %cst_49 {dimension_numbers = #tpu.dot_dimension_numbers<[1], [0], [0], [1], [0, 0, 1, 1], [], []>} : vector<8x16xf32>, vector<16x4xf32>, vector<8x4xf32> -> vector<8x4xf32>
      %79 = vector.broadcast %17 : vector<1x4xf32> to vector<8x4xf32>
      %80 = arith.addf %78, %79 : vector<8x4xf32>
      %c56 = arith.constant 56 : index
      %c0_50 = arith.constant 0 : index
      %81 = vector.load %arg5[%c56, %c0_50] : memref<64x4xf32, #tpu.memory_space<vmem>>, vector<8x4xf32>
      tpu.vector_store %arg5[%c56, %c0_50], %80 {strides = array<i32>} : memref<64x4xf32, #tpu.memory_space<vmem>>, vector<8x4xf32>,
    } else {
    }
    return
  }
  func.func @transform_0(%arg0: i32) -> (i32, i32, i32) {
    %c0_i32 = arith.constant 0 : i32
    %c0_i32_0 = arith.constant 0 : i32
    %c0_i32_1 = arith.constant 0 : i32
    %c0_i32_2 = arith.constant 0 : i32
    return %c0_i32, %c0_i32_0, %c0_i32_1 : i32, i32, i32
  }
  func.func @transform_1(%arg0: i32) -> (i32, i32, i32) {
    %c0_i32 = arith.constant 0 : i32
    %c0_i32_0 = arith.constant 0 : i32
    %c0_i32_1 = arith.constant 0 : i32
    return %arg0, %c0_i32, %c0_i32_0 : i32, i32, i32
  }
  func.func @transform_2(%arg0: i32) -> (i32, i32) {
    %c0_i32 = arith.constant 0 : i32
    %c0_i32_0 = arith.constant 0 : i32
    %c0_i32_1 = arith.constant 0 : i32
    return %c0_i32, %c0_i32_0 : i32, i32
  }
  func.func @transform_3(%arg0: i32) -> (i32, i32) {
    %c0_i32 = arith.constant 0 : i32
    %c0_i32_0 = arith.constant 0 : i32
    %c0_i32_1 = arith.constant 0 : i32
    return %c0_i32, %c0_i32_0 : i32, i32
  }
  func.func @transform_4(%arg0: i32) -> (i32, i32) {
    %c0_i32 = arith.constant 0 : i32
    %c0_i32_0 = arith.constant 0 : i32
    %c0_i32_1 = arith.constant 0 : i32
    return %c0_i32, %c0_i32_0 : i32, i32
  }
}

</mosaic_0001>

<llo_original>
// kernel: dqn_forward_pallas.1
$region0: #{dqn_forward_pallas.1}
  #allocation0 [shape = 'u32[]', space=smem, size = 0x4, offset = 0x4, fixed_abs, tag = 'smem constant byte address 0x4 - core index']
  #allocation1 [shape = 'u32[144,128]{1,0:T(1,128)}', space=vmem, size = 0x12000, scoped, tag = 'internal scratch']
  #allocation2 [shape = 'f32[8,8,16]{2,1,0:T(8,128)}', space=vmem, size = 0x8000, scoped, tag = 'scratch operand']
  %s0 = inlined_call_operand.vmem [shape: f32[8,8,16], index: 0, kind: input, shape index: {}]
  %s1 = inlined_call_operand.hbm [shape: f32[20,264,512], index: 1, kind: input, shape index: {}]
  %s2 = inlined_call_operand.vmem [shape: f32[16,4], index: 2, kind: input, shape index: {}]
  %s3 = inlined_call_operand.hbm [shape: f32[1,4], index: 3, kind: input, shape index: {}]
  %s4 = inlined_call_operand.vmem [shape: f32[64,4], index: 4, kind: output, shape index: {}]
  %s5 = sld [smem:[#allocation0]]
  $region76: #{dqn_forward_pallas.1} parent=0
    _
  %s7 = ssub.s32 1, %s5
  %s8 = scalar_select 0, %s7, %s5
  $region1: #{dqn_forward_pallas.1} parent=0
    #allocation3 [shape = 'u8[1081344]{0}', space=vmem, size = 0x108000, scoped, tag = 'input window, operand 1']
    #allocation4 [shape = 's32[2]{0}', space=sflag, size = 0x8, scoped, tag = 'scoped memory for dqn_forward_pallas.1']
    #allocation5 [shape = 'u8[512]{0}', space=vmem, size = 0x400, scoped, tag = 'input window, operand 3, single buffered']
    #allocation6 [shape = 's32[1]{0}', space=sflag, size = 0x4, scoped, tag = 'scoped memory for dqn_forward_pallas.1']
    %9 = vsyncpa [#allocation4], 0
    %s10 = scalar_lea.sflag [#allocation4], 1
    %11 = vsyncpa %s10, 0
    %12 = vsyncpa [#allocation6], 0
    loop: start=0, step=1, limit=22
    $region2: #{dqn_forward_pallas.1} parent=1 // loop_pre_header
      _
    $region3: #{dqn_forward_pallas.1} parent=1 // loop_header
      %s14 = sphi 0, %s18
      %p15 = scmp.ge.s32.totalorder %s14, 22
      %s22 = sphi 0, %s22
      %s24 = sphi 0, %s22
      %s25 = sphi 0, %s24
      %s39 = sphi 0, %s25
      %s45 = sphi 0, %s47
      %s48 = sphi 0, %s45
      %s49 = sphi 0, %s48
      %s65 = sphi 0, %s49
      %s69 = sphi 0, %s69
      %s71 = sphi 0, %s69
      %s72 = sphi 0, %s71
      %s86 = sphi 0, %s72
      %s90 = sphi 0, %s90
      %s92 = sphi 0, %s90
      %s93 = sphi 0, %s92
      %s107 = sphi 0, %s93
      %s111 = sphi 0, %s111
      %s113 = sphi 0, %s111
      %s114 = sphi 0, %s113
      %s128 = sphi 0, %s114
    $region4: #{dqn_forward_pallas.1} parent=1 // loop_header_branch
      %17 = sbr.rel (%p15) target = $region8
    $region5: #{dqn_forward_pallas.1} parent=1 // loop_body
      %s19 = ssub.s32 %s14, 1
      %s20 = ssub.s32 %s14, 2
      %s21 = sadd.s32 %s14, 1
      %s23 = sadd.s32 %s22, 1
      %p26 = scmp.eq.s32.totalorder %s14, 19
      %p27 = scmp.ne.s32.totalorder %s22, %s24
      %p28 = scmp.eq.s32.totalorder %s14, 0
      %p29 = por %p27, %p28
      %p30 = scmp.ne.s32.totalorder %s22, %s24
      %p31 = scmp.eq.s32.totalorder %s19, 19
      %p32 = por %p30, %p31
      %p33 = scmp.ne.s32.totalorder %s24, %s25
      %p34 = scmp.eq.s32.totalorder %s19, 0
      %p35 = por %p33, %p34
      %p36 = scmp.ne.s32.totalorder %s24, %s25
      %p37 = scmp.eq.s32.totalorder %s20, 19
      %p38 = por %p36, %p37
      %p40 = scmp.ne.s32.totalorder %s25, %s39
      %p41 = scmp.eq.s32.totalorder %s20, 0
      %p42 = por %p40, %p41
      %s43 = ssub.s32 %s14, %s21
      %p44 = scmp.eq.s32.totalorder %s43, 0
      %s46 = sadd.s32 %s45, 1
      %s47 = scalar_select %p44, %s45, %s46
      %p50 = pneg %p44
      %p51 = scmp.eq.s32.totalorder %s14, 19
      %p52 = por %p50, %p51
      %p53 = scmp.ne.s32.totalorder %s45, %s48
      %p54 = scmp.eq.s32.totalorder %s14, 0
      %p55 = por %p53, %p54
      %p56 = scmp.ne.s32.totalorder %s45, %s48
      %p57 = scmp.eq.s32.totalorder %s19, 19
      %p58 = por %p56, %p57
      %p59 = scmp.ne.s32.totalorder %s48, %s49
      %p60 = scmp.eq.s32.totalorder %s19, 0
      %p61 = por %p59, %p60
      %p62 = scmp.ne.s32.totalorder %s48, %s49
      %p63 = scmp.eq.s32.totalorder %s20, 19
      %p64 = por %p62, %p63
      %p66 = scmp.ne.s32.totalorder %s49, %s65
      %p67 = scmp.eq.s32.totalorder %s20, 0
      %p68 = por %p66, %p67
      %s70 = sadd.s32 %s69, 1
      %p73 = scmp.eq.s32.totalorder %s14, 19
      %p74 = scmp.ne.s32.totalorder %s69, %s71
      %p75 = scmp.eq.s32.totalorder %s14, 0
      %p76 = por %p74, %p75
      %p77 = scmp.ne.s32.totalorder %s69, %s71
      %p78 = scmp.eq.s32.totalorder %s19, 19
      %p79 = por %p77, %p78
      %p80 = scmp.ne.s32.totalorder %s71, %s72
      %p81 = scmp.eq.s32.totalorder %s19, 0
      %p82 = por %p80, %p81
      %p83 = scmp.ne.s32.totalorder %s71, %s72
      %p84 = scmp.eq.s32.totalorder %s20, 19
      %p85 = por %p83, %p84
      %p87 = scmp.ne.s32.totalorder %s72, %s86
      %p88 = scmp.eq.s32.totalorder %s20, 0
      %p89 = por %p87, %p88
      %s91 = sadd.s32 %s90, 1
      %p94 = scmp.eq.s32.totalorder %s14, 19
      %p95 = scmp.ne.s32.totalorder %s90, %s92
      %p96 = scmp.eq.s32.totalorder %s14, 0
      %p97 = por %p95, %p96
      %p98 = scmp.ne.s32.totalorder %s90, %s92
      %p99 = scmp.eq.s32.totalorder %s19, 19
      %p100 = por %p98, %p99
      %p101 = scmp.ne.s32.totalorder %s92, %s93
      %p102 = scmp.eq.s32.totalorder %s19, 0
      %p103 = por %p101, %p102
      %p104 = scmp.ne.s32.totalorder %s92, %s93
      %p105 = scmp.eq.s32.totalorder %s20, 19
      %p106 = por %p104, %p105
      %p108 = scmp.ne.s32.totalorder %s93, %s107
      %p109 = scmp.eq.s32.totalorder %s20, 0
      %p110 = por %p108, %p109
      %s112 = sadd.s32 %s111, 1
      %p115 = scmp.eq.s32.totalorder %s14, 19
      %p116 = scmp.ne.s32.totalorder %s111, %s113
      %p117 = scmp.eq.s32.totalorder %s14, 0
      %p118 = por %p116, %p117
      %p119 = scmp.ne.s32.totalorder %s111, %s113
      %p120 = scmp.eq.s32.totalorder %s19, 19
      %p121 = por %p119, %p120
      %p122 = scmp.ne.s32.totalorder %s113, %s114
      %p123 = scmp.eq.s32.totalorder %s19, 0
      %p124 = por %p122, %p123
      %p125 = scmp.ne.s32.totalorder %s113, %s114
      %p126 = scmp.eq.s32.totalorder %s20, 19
      %p127 = por %p125, %p126
      %p129 = scmp.ne.s32.totalorder %s114, %s128
      %p130 = scmp.eq.s32.totalorder %s20, 0
      %p131 = por %p129, %p130
      %p132 = scmp.le.s32.totalorder 1, %s14
      %p133 = scmp.lt.s32.totalorder %s14, 21
      %p134 = pnand %p132, %p133
      %p135 = pneg %p134
      // Predicated region
      $region9: #{dqn_forward_pallas.1} parent=5 // pred_check
        _
      $region10: #{dqn_forward_pallas.1} parent=5 // pred_check_branch
        %137 = sbr.rel (%p134) target = $region12
      $region11: #{dqn_forward_pallas.1} parent=5 // pred_region
        %s138 = ssub.s32 %s14, 1
        // Predicated region
        $region13: #{dqn_forward_pallas.1} parent=11 // pred_check
          %p139 = pneg %p35
        $region14: #{dqn_forward_pallas.1} parent=11 // pred_check_branch
          %141 = sbr.rel (%p139) target = $region16
        $region15: #{dqn_forward_pallas.1} parent=11 // pred_region
          _
        $region16: #{dqn_forward_pallas.1} parent=11 // pred_fallthru
          _
        // Predicated region
        $region17: #{dqn_forward_pallas.1} parent=11 // pred_check
          %p142 = pneg %p82
        $region18: #{dqn_forward_pallas.1} parent=11 // pred_check_branch
          %144 = sbr.rel (%p142) target = $region20
        $region19: #{dqn_forward_pallas.1} parent=11 // pred_region
          _
        $region20: #{dqn_forward_pallas.1} parent=11 // pred_fallthru
          _
        // Predicated region
        $region21: #{dqn_forward_pallas.1} parent=11 // pred_check
          %p145 = pneg %p103
        $region22: #{dqn_forward_pallas.1} parent=11 // pred_check_branch
          %147 = sbr.rel (%p145) target = $region24
        $region23: #{dqn_forward_pallas.1} parent=11 // pred_region
          %s149 = ssub.s32 16, 16
          %150 = vsyncadd [#allocation6], %s149
          %s152 = sshll.u32 [#allocation5], 4
          %s153 = int_to_ptr.vmem [resolvable:$true] %s152
          %155 = dma.hbm_to_vmem [thread:$0]  %s3, 16, %s153, [#allocation6]
        $region24: #{dqn_forward_pallas.1} parent=11 // pred_fallthru
          _
      $region12: #{dqn_forward_pallas.1} parent=5 // pred_fallthru
        _
      %p156 = scmp.lt.s32.totalorder %s14, 20
      // Predicated region
      $region25: #{dqn_forward_pallas.1} parent=5 // pred_check
        %p157 = pneg %p156
      $region26: #{dqn_forward_pallas.1} parent=5 // pred_check_branch
        %159 = sbr.rel (%p157) target = $region28
      $region27: #{dqn_forward_pallas.1} parent=5 // pred_region
        // Predicated region
        $region29: #{dqn_forward_pallas.1} parent=27 // pred_check
          %p160 = pneg %p55
        $region30: #{dqn_forward_pallas.1} parent=27 // pred_check_branch
          %162 = sbr.rel (%p160) target = $region32
        $region31: #{dqn_forward_pallas.1} parent=27 // pred_region
          %s163 = sand.u32 %s45, 1
          %s164 = scalar_lea.sflag [#allocation4], %s163
          %s165 = sand.u32 %s45, 1
          %s166 = smul.addr %s165, 1056
          %s167 = scalar_lea.vmem [#allocation3], %s166
          %s169 = ssub.s32 16896, 16896
          %170 = vsyncadd %s164, %s169
          %s171 = smul.addr %s14, 132
          %s172 = smul.addr %s171, 128
          %s173 = scalar_lea.hbm %s1, %s172
          %s174 = sshll.u32 %s167, 4
          %s175 = int_to_ptr.vmem [resolvable:$true] %s174
          %180 = dma.hbm_to_vmem [thread:$0]  %s173, 16896, %s175, %s164, 512, 512, 32
        $region32: #{dqn_forward_pallas.1} parent=27 // pred_fallthru
          _
      $region28: #{dqn_forward_pallas.1} parent=5 // pred_fallthru
        _
      %p181 = scmp.le.s32.totalorder 1, %s14
      %p182 = scmp.lt.s32.totalorder %s14, 21
      %p183 = pnand %p181, %p182
      %p184 = pneg %p183
      // Predicated region
      $region33: #{dqn_forward_pallas.1} parent=5 // pred_check
        _
      $region34: #{dqn_forward_pallas.1} parent=5 // pred_check_branch
        %186 = sbr.rel (%p183) target = $region36
      $region35: #{dqn_forward_pallas.1} parent=5 // pred_region
        %s187 = ssub.s32 %s14, 1
        %s188 = sand.u32 %s48, 1
        %s189 = scalar_lea.sflag [#allocation4], %s188
        %s190 = sand.u32 %s48, 1
        %s191 = smul.addr %s190, 1056
        %s192 = scalar_lea.vmem [#allocation3], %s191
        // Predicated region
        $region37: #{dqn_forward_pallas.1} parent=35 // pred_check
          %p193 = pneg %p61
        $region38: #{dqn_forward_pallas.1} parent=35 // pred_check_branch
          %195 = sbr.rel (%p193) target = $region40
        $region39: #{dqn_forward_pallas.1} parent=35 // pred_region
          %196 = dma.done %s189, 16896
        $region40: #{dqn_forward_pallas.1} parent=35 // pred_fallthru
          _
        // Predicated region
        $region41: #{dqn_forward_pallas.1} parent=35 // pred_check
          %p197 = pneg %p103
        $region42: #{dqn_forward_pallas.1} parent=35 // pred_check_branch
          %199 = sbr.rel (%p197) target = $region44
        $region43: #{dqn_forward_pallas.1} parent=35 // pred_region
          %200 = dma.done [#allocation6], 16
        $region44: #{dqn_forward_pallas.1} parent=35 // pred_fallthru
          _
        %p201 = pneg %p35
        %p202 = pneg %p32
        %s203 = sand.u32 %s48, 1
        %s204 = scalar_lea.sflag [#allocation4], %s203
        %s205 = sand.u32 %s48, 1
        %s206 = smul.addr %s205, 1056
        %s207 = scalar_lea.vmem [#allocation3], %s206
        %p208 = pneg %p61
        %p209 = pneg %p58
        %p210 = pneg %p82
        %p211 = pneg %p79
        %p212 = pneg %p103
        %p213 = pneg %p100
        %p214 = pneg %p124
        %p215 = pneg %p121
        %p216 = scmp.eq.s32.totalorder %s19, 0
        // Predicated region
        $region45: #{dqn_forward_pallas.1} parent=35 // pred_check
          %p217 = pneg %p216
        $region46: #{dqn_forward_pallas.1} parent=35 // pred_check_branch
          %219 = sbr.rel (%p217) target = $region48
        $region47: #{dqn_forward_pallas.1} parent=35 // pred_region
          %v220 = vld [vmem:[%s0] sm:$0xff]
          %v221 = vld [vmem:[%s0 + $0x8] sm:$0xff]
          %v222 = vld [vmem:[%s0 + $0x10] sm:$0xff]
          %v223 = vld [vmem:[%s0 + $0x18] sm:$0xff]
          %v224 = vld [vmem:[%s0 + $0x20] sm:$0xff]
          %v225 = vld [vmem:[%s0 + $0x28] sm:$0xff]
          %v226 = vld [vmem:[%s0 + $0x30] sm:$0xff]
          %v227 = vld [vmem:[%s0 + $0x38] sm:$0xff]
          %vm228 = vcmask 130048
          %229 = vst.msk [vmem:[#allocation2] sm:$0xff] %vm228, %v220
          %230 = vst.msk [vmem:[#allocation2 + $0x8] sm:$0xff] %vm228, %v221
          %231 = vst.msk [vmem:[#allocation2 + $0x10] sm:$0xff] %vm228, %v222
          %232 = vst.msk [vmem:[#allocation2 + $0x18] sm:$0xff] %vm228, %v223
          %233 = vst.msk [vmem:[#allocation2 + $0x20] sm:$0xff] %vm228, %v224
          %234 = vst.msk [vmem:[#allocation2 + $0x28] sm:$0xff] %vm228, %v225
          %235 = vst.msk [vmem:[#allocation2 + $0x30] sm:$0xff] %vm228, %v226
          %236 = vst.msk [vmem:[#allocation2 + $0x38] sm:$0xff] %vm228, %v227
        $region48: #{dqn_forward_pallas.1} parent=35 // pred_fallthru
          _
        %v237 = vlaneseq
        %v238 = vand.u32 %v237, 127
        loop: start=0, step=1, limit=15
        $region49: #{dqn_forward_pallas.1} parent=35 // loop_pre_header
          _
        $region50: #{dqn_forward_pallas.1} parent=35 // loop_header
          %s240 = sphi 0, %s244
          %p241 = scmp.ge.s32.totalorder %s240, 15
          %v245 = vphi 0.0, %v713
          %v246 = vphi 0.0, %v711
        $region51: #{dqn_forward_pallas.1} parent=35 // loop_header_branch
          %243 = sbr.rel (%p241) target = $region55
        $region52: #{dqn_forward_pallas.1} parent=35 // loop_body
          %p247 = scmp.lt.s32.totalorder %s240, 8
          %s248 = scalar_select %p247, %s240, 8
          %s249 = smul.u32 %s248, 16
          %v250 = vstv %s249
          %vm251 = vcmp.lt.s32.totalorder %v238, %v250
          %v252 = vsel %vm251, %v245, 0.0
          %v253 = vsel %vm251, %v246, 0.0
          %p254 = scmp.lt.s32.totalorder %s240, 7
          %s255 = scalar_select %p254, %s240, 7
          %s256 = smul.u32 %s255, 8
          %s257 = scalar_lea.vmem [#allocation2], %s256
          %v258 = vld [vmem:[%s257] sm:$0xff]
          %p259 = scmp.lt.s32.totalorder %s240, 8
          %s260 = scalar_select %p259, 1, 0
          %v261 = vstv %s260
          %vm262 = vcmp.eq.s32.totalorder %v261, 1
          %264 = vrot.lane.b32.xlu0 %v252, 16
          %v265 = vpop.permute.xlu0 %264
          %v267 = vsel %vm262, %v258, %v265
          %vm268 = vcmask 130048
          %v269 = vsel %vm268, %v267, %v265
          %v270 = vld [vmem:[%s192] sm:$0xff]
          %v271 = vld [vmem:[%s192 + $0x8] sm:$0xff]
          %v272 = vld [vmem:[%s192 + $0x10] sm:$0xff]
          %v273 = vld [vmem:[%s192 + $0x18] sm:$0xff]
          %v274 = vld [vmem:[%s192 + $0x20] sm:$0xff]
          %v275 = vld [vmem:[%s192 + $0x28] sm:$0xff]
          %v276 = vld [vmem:[%s192 + $0x30] sm:$0xff]
          %v277 = vld [vmem:[%s192 + $0x38] sm:$0xff]
          %v278 = vld [vmem:[%s192 + $0x40] sm:$0xff]
          %v279 = vld [vmem:[%s192 + $0x48] sm:$0xff]
          %v280 = vld [vmem:[%s192 + $0x50] sm:$0xff]
          %v281 = vld [vmem:[%s192 + $0x58] sm:$0xff]
          %v282 = vld [vmem:[%s192 + $0x60] sm:$0xff]
          %v283 = vld [vmem:[%s192 + $0x68] sm:$0xff]
          %v284 = vld [vmem:[%s192 + $0x70] sm:$0xff]
          %v285 = vld [vmem:[%s192 + $0x78] sm:$0xff]
          %v286 = vld [vmem:[%s192 + $0x80] sm:$0xff]
          %v287 = vld [vmem:[%s192 + $0x88] sm:$0xff]
          %v288 = vld [vmem:[%s192 + $0x90] sm:$0xff]
          %v289 = vld [vmem:[%s192 + $0x98] sm:$0xff]
          %v290 = vld [vmem:[%s192 + $0xa0] sm:$0xff]
          %v291 = vld [vmem:[%s192 + $0xa8] sm:$0xff]
          %v292 = vld [vmem:[%s192 + $0xb0] sm:$0xff]
          %v293 = vld [vmem:[%s192 + $0xb8] sm:$0xff]
          %v294 = vld [vmem:[%s192 + $0xc0] sm:$0xff]
          %v295 = vld [vmem:[%s192 + $0xc8] sm:$0xff]
          %v296 = vld [vmem:[%s192 + $0xd0] sm:$0xff]
          %v297 = vld [vmem:[%s192 + $0xd8] sm:$0xff]
          %v298 = vld [vmem:[%s192 + $0xe0] sm:$0xff]
          %v299 = vld [vmem:[%s192 + $0xe8] sm:$0xff]
          %v300 = vld [vmem:[%s192 + $0xf0] sm:$0xff]
          %v301 = vld [vmem:[%s192 + $0xf8] sm:$0xff]
          %v302 = vld [vmem:[%s192 + $0x100] sm:$0xff]
          %v303 = vld [vmem:[%s192 + $0x108] sm:$0xff]
          %v304 = vld [vmem:[%s192 + $0x110] sm:$0xff]
          %v305 = vld [vmem:[%s192 + $0x118] sm:$0xff]
          %v306 = vld [vmem:[%s192 + $0x120] sm:$0xff]
          %v307 = vld [vmem:[%s192 + $0x128] sm:$0xff]
          %v308 = vld [vmem:[%s192 + $0x130] sm:$0xff]
          %v309 = vld [vmem:[%s192 + $0x138] sm:$0xff]
          %v310 = vld [vmem:[%s192 + $0x140] sm:$0xff]
          %v311 = vld [vmem:[%s192 + $0x148] sm:$0xff]
          %v312 = vld [vmem:[%s192 + $0x150] sm:$0xff]
          %v313 = vld [vmem:[%s192 + $0x158] sm:$0xff]
          %v314 = vld [vmem:[%s192 + $0x160] sm:$0xff]
          %v315 = vld [vmem:[%s192 + $0x168] sm:$0xff]
          %v316 = vld [vmem:[%s192 + $0x170] sm:$0xff]
          %v317 = vld [vmem:[%s192 + $0x178] sm:$0xff]
          %v318 = vld [vmem:[%s192 + $0x180] sm:$0xff]
          %v319 = vld [vmem:[%s192 + $0x188] sm:$0xff]
          %v320 = vld [vmem:[%s192 + $0x190] sm:$0xff]
          %v321 = vld [vmem:[%s192 + $0x198] sm:$0xff]
          %v322 = vld [vmem:[%s192 + $0x1a0] sm:$0xff]
          %v323 = vld [vmem:[%s192 + $0x1a8] sm:$0xff]
          %v324 = vld [vmem:[%s192 + $0x1b0] sm:$0xff]
          %v325 = vld [vmem:[%s192 + $0x1b8] sm:$0xff]
          %v326 = vld [vmem:[%s192 + $0x1c0] sm:$0xff]
          %v327 = vld [vmem:[%s192 + $0x1c8] sm:$0xff]
          %v328 = vld [vmem:[%s192 + $0x1d0] sm:$0xff]
          %v329 = vld [vmem:[%s192 + $0x1d8] sm:$0xff]
          %v330 = vld [vmem:[%s192 + $0x1e0] sm:$0xff]
          %v331 = vld [vmem:[%s192 + $0x1e8] sm:$0xff]
          %v332 = vld [vmem:[%s192 + $0x1f0] sm:$0xff]
          %v333 = vld [vmem:[%s192 + $0x1f8] sm:$0xff]
          %v334 = vld [vmem:[%s192 + $0x200] sm:$0xff]
          %v335 = vld [vmem:[%s192 + $0x208] sm:$0xff]
          %v336 = vld [vmem:[%s192 + $0x210] sm:$0xff]
          %v337 = vld [vmem:[%s192 + $0x218] sm:$0xff]
          %v338 = vld [vmem:[%s192 + $0x220] sm:$0xff]
          %v339 = vld [vmem:[%s192 + $0x228] sm:$0xff]
          %v340 = vld [vmem:[%s192 + $0x230] sm:$0xff]
          %v341 = vld [vmem:[%s192 + $0x238] sm:$0xff]
          %v342 = vld [vmem:[%s192 + $0x240] sm:$0xff]
          %v343 = vld [vmem:[%s192 + $0x248] sm:$0xff]
          %v344 = vld [vmem:[%s192 + $0x250] sm:$0xff]
          %v345 = vld [vmem:[%s192 + $0x258] sm:$0xff]
          %v346 = vld [vmem:[%s192 + $0x260] sm:$0xff]
          %v347 = vld [vmem:[%s192 + $0x268] sm:$0xff]
          %v348 = vld [vmem:[%s192 + $0x270] sm:$0xff]
          %v349 = vld [vmem:[%s192 + $0x278] sm:$0xff]
          %v350 = vld [vmem:[%s192 + $0x280] sm:$0xff]
          %v351 = vld [vmem:[%s192 + $0x288] sm:$0xff]
          %v352 = vld [vmem:[%s192 + $0x290] sm:$0xff]
          %v353 = vld [vmem:[%s192 + $0x298] sm:$0xff]
          %v354 = vld [vmem:[%s192 + $0x2a0] sm:$0xff]
          %v355 = vld [vmem:[%s192 + $0x2a8] sm:$0xff]
          %v356 = vld [vmem:[%s192 + $0x2b0] sm:$0xff]
          %v357 = vld [vmem:[%s192 + $0x2b8] sm:$0xff]
          %v358 = vld [vmem:[%s192 + $0x2c0] sm:$0xff]
          %v359 = vld [vmem:[%s192 + $0x2c8] sm:$0xff]
          %v360 = vld [vmem:[%s192 + $0x2d0] sm:$0xff]
          %v361 = vld [vmem:[%s192 + $0x2d8] sm:$0xff]
          %v362 = vld [vmem:[%s192 + $0x2e0] sm:$0xff]
          %v363 = vld [vmem:[%s192 + $0x2e8] sm:$0xff]
          %v364 = vld [vmem:[%s192 + $0x2f0] sm:$0xff]
          %v365 = vld [vmem:[%s192 + $0x2f8] sm:$0xff]
          %v366 = vld [vmem:[%s192 + $0x300] sm:$0xff]
          %v367 = vld [vmem:[%s192 + $0x308] sm:$0xff]
          %v368 = vld [vmem:[%s192 + $0x310] sm:$0xff]
          %v369 = vld [vmem:[%s192 + $0x318] sm:$0xff]
          %v370 = vld [vmem:[%s192 + $0x320] sm:$0xff]
          %v371 = vld [vmem:[%s192 + $0x328] sm:$0xff]
          %v372 = vld [vmem:[%s192 + $0x330] sm:$0xff]
          %v373 = vld [vmem:[%s192 + $0x338] sm:$0xff]
          %v374 = vld [vmem:[%s192 + $0x340] sm:$0xff]
          %v375 = vld [vmem:[%s192 + $0x348] sm:$0xff]
          %v376 = vld [vmem:[%s192 + $0x350] sm:$0xff]
          %v377 = vld [vmem:[%s192 + $0x358] sm:$0xff]
          %v378 = vld [vmem:[%s192 + $0x360] sm:$0xff]
          %v379 = vld [vmem:[%s192 + $0x368] sm:$0xff]
          %v380 = vld [vmem:[%s192 + $0x370] sm:$0xff]
          %v381 = vld [vmem:[%s192 + $0x378] sm:$0xff]
          %v382 = vld [vmem:[%s192 + $0x380] sm:$0xff]
          %v383 = vld [vmem:[%s192 + $0x388] sm:$0xff]
          %v384 = vld [vmem:[%s192 + $0x390] sm:$0xff]
          %v385 = vld [vmem:[%s192 + $0x398] sm:$0xff]
          %v386 = vld [vmem:[%s192 + $0x3a0] sm:$0xff]
          %v387 = vld [vmem:[%s192 + $0x3a8] sm:$0xff]
          %v388 = vld [vmem:[%s192 + $0x3b0] sm:$0xff]
          %v389 = vld [vmem:[%s192 + $0x3b8] sm:$0xff]
          %v390 = vld [vmem:[%s192 + $0x3c0] sm:$0xff]
          %v391 = vld [vmem:[%s192 + $0x3c8] sm:$0xff]
          %v392 = vld [vmem:[%s192 + $0x3d0] sm:$0xff]
          %v393 = vld [vmem:[%s192 + $0x3d8] sm:$0xff]
          %v394 = vld [vmem:[%s192 + $0x3e0] sm:$0xff]
          %v395 = vld [vmem:[%s192 + $0x3e8] sm:$0xff]
          %v396 = vld [vmem:[%s192 + $0x3f0] sm:$0xff]
          %v397 = vld [vmem:[%s192 + $0x3f8] sm:$0xff]
          %v398 = vld [vmem:[%s192 + $0x400] sm:$0xff]
          %v399 = vld [vmem:[%s192 + $0x408] sm:$0xff]
          %v400 = vld [vmem:[%s192 + $0x410] sm:$0xff]
          %v401 = vld [vmem:[%s192 + $0x418] sm:$0xff]
          %vm402 = vcmask 64512
          %v404 = vsel %vm402, 1.0, 0
          %406 = vmatprep.subr.mxu0 %v271
          %407 = vmatpush1.msra.mxu0 %v270
          %408 = vmatprep.subr.mxu0 %v275
          %409 = vmatpush1.msra.mxu0 %v274
          %410 = vmatprep.subr.mxu0 %v279
          %411 = vmatpush1.msra.mxu0 %v278
          %412 = vmatprep.subr.mxu0 %v283
          %413 = vmatpush1.msra.mxu0 %v282
          %414 = vmatprep.subr.mxu0 %v287
          %415 = vmatpush1.msra.mxu0 %v286
          %416 = vmatprep.subr.mxu0 %v291
          %417 = vmatpush1.msra.mxu0 %v290
          %418 = vmatprep.subr.mxu0 %v295
          %419 = vmatpush1.msra.mxu0 %v294
          %420 = vmatprep.subr.mxu0 %v299
          %421 = vmatpush1.msra.mxu0 %v298
          %422 = vmatprep.subr.mxu0 %v303
          %423 = vmatpush1.msra.mxu0 %v302
          %424 = vmatprep.subr.mxu0 %v307
          %425 = vmatpush1.msra.mxu0 %v306
          %426 = vmatprep.subr.mxu0 %v311
          %427 = vmatpush1.msra.mxu0 %v310
          %428 = vmatprep.subr.mxu0 %v315
          %429 = vmatpush1.msra.mxu0 %v314
          %430 = vmatprep.subr.mxu0 %v319
          %431 = vmatpush1.msra.mxu0 %v318
          %432 = vmatprep.subr.mxu0 %v323
          %433 = vmatpush1.msra.mxu0 %v322
          %434 = vmatprep.subr.mxu0 %v327
          %435 = vmatpush1.msra.mxu0 %v326
          %436 = vmatprep.subr.mxu0 %v331
          %437 = vmatpush1.msra.mxu0 %v330
          %438 = vmatprep.subr.mxu0 %v335
          %439 = vmatpush1.msra.mxu0 %v334
          %440 = vmatprep.subr.mxu0 %v339
          %441 = vmatpush1.msra.mxu0 %v338
          %442 = vmatprep.subr.mxu0 %v343
          %443 = vmatpush1.msra.mxu0 %v342
          %444 = vmatprep.subr.mxu0 %v347
          %445 = vmatpush1.msra.mxu0 %v346
          %446 = vmatprep.subr.mxu0 %v351
          %447 = vmatpush1.msra.mxu0 %v350
          %448 = vmatprep.subr.mxu0 %v355
          %449 = vmatpush1.msra.mxu0 %v354
          %450 = vmatprep.subr.mxu0 %v359
          %451 = vmatpush1.msra.mxu0 %v358
          %452 = vmatprep.subr.mxu0 %v363
          %453 = vmatpush1.msra.mxu0 %v362
          %454 = vmatprep.subr.mxu0 %v367
          %455 = vmatpush1.msra.mxu0 %v366
          %456 = vmatprep.subr.mxu0 %v371
          %457 = vmatpush1.msra.mxu0 %v370
          %458 = vmatprep.subr.mxu0 %v375
          %459 = vmatpush1.msra.mxu0 %v374
          %460 = vmatprep.subr.mxu0 %v379
          %461 = vmatpush1.msra.mxu0 %v378
          %462 = vmatprep.subr.mxu0 %v383
          %463 = vmatpush1.msra.mxu0 %v382
          %464 = vmatprep.subr.mxu0 %v387
          %465 = vmatpush1.msra.mxu0 %v386
          %466 = vmatprep.subr.mxu0 %v391
          %467 = vmatpush1.msra.mxu0 %v390
          %468 = vmatprep.subr.mxu0 %v395
          %469 = vmatpush1.msra.mxu0 %v394
          %470 = vmatprep.mubr.f32.mxu0 %v269
          %471 = vmatmul.mubr.f32.gmra.mrb[0].mxu0 %v252
          %v472 = vpop.f32.mrb[0].mxu0
          %v473 = vadd.f32 0.0, %v472
          %v474 = vpop.f32.mrb[0].mxu0
          %v475 = vadd.f32 0.0, %v474
          %476 = vdwg.mxu0
          %477 = vmatprep.subr.mxu0 %v399
          %478 = vmatpush1.msra.mxu0 %v398
          %479 = vmatprep.subr.mxu0 0.0
          %480 = vmatpush1.msra.mxu0 0.0
          %481 = vmatprep.subr.mxu0 0.0
          %482 = vmatpush1.msra.mxu0 0.0
          %483 = vmatprep.subr.mxu0 0.0
          %484 = vmatpush1.msra.mxu0 0.0
          %485 = vmatprep.subr.mxu0 0.0
          %486 = vmatpush1.msra.mxu0 0.0
          %487 = vmatprep.subr.mxu0 0.0
          %488 = vmatpush1.msra.mxu0 0.0
          %489 = vmatprep.subr.mxu0 0.0
          %490 = vmatpush1.msra.mxu0 0.0
          %491 = vmatprep.subr.mxu0 0.0
          %492 = vmatpush1.msra.mxu0 0.0
          %493 = vmatprep.subr.mxu0 0.0
          %494 = vmatpush1.msra.mxu0 0.0
          %495 = vmatprep.subr.mxu0 0.0
          %496 = vmatpush1.msra.mxu0 0.0
          %497 = vmatprep.subr.mxu0 0.0
          %498 = vmatpush1.msra.mxu0 0.0
          %499 = vmatprep.subr.mxu0 0.0
          %500 = vmatpush1.msra.mxu0 0.0
          %501 = vmatprep.subr.mxu0 0.0
          %502 = vmatpush1.msra.mxu0 0.0
          %503 = vmatprep.subr.mxu0 0.0
          %504 = vmatpush1.msra.mxu0 0.0
          %505 = vmatprep.subr.mxu0 0.0
          %506 = vmatpush1.msra.mxu0 0.0
          %507 = vmatprep.subr.mxu0 0.0
          %508 = vmatpush1.msra.mxu0 0.0
          %509 = vmatprep.subr.mxu0 0.0
          %510 = vmatpush1.msra.mxu0 0.0
          %511 = vmatprep.subr.mxu0 0.0
          %512 = vmatpush1.msra.mxu0 0.0
          %513 = vmatprep.subr.mxu0 0.0
          %514 = vmatpush1.msra.mxu0 0.0
          %515 = vmatprep.subr.mxu0 0.0
          %516 = vmatpush1.msra.mxu0 0.0
          %517 = vmatprep.subr.mxu0 0.0
          %518 = vmatpush1.msra.mxu0 0.0
          %519 = vmatprep.subr.mxu0 0.0
          %520 = vmatpush1.msra.mxu0 0.0
          %521 = vmatprep.subr.mxu0 0.0
          %522 = vmatpush1.msra.mxu0 0.0
          %523 = vmatprep.subr.mxu0 0.0
          %524 = vmatpush1.msra.mxu0 0.0
          %525 = vmatprep.subr.mxu0 0.0
          %526 = vmatpush1.msra.mxu0 0.0
          %527 = vmatprep.subr.mxu0 0.0
          %528 = vmatpush1.msra.mxu0 0.0
          %529 = vmatprep.subr.mxu0 0.0
          %530 = vmatpush1.msra.mxu0 0.0
          %531 = vmatprep.subr.mxu0 0.0
          %532 = vmatpush1.msra.mxu0 0.0
          %533 = vmatprep.subr.mxu0 0.0
          %534 = vmatpush1.msra.mxu0 0.0
          %535 = vmatprep.subr.mxu0 0.0
          %536 = vmatpush1.msra.mxu0 0.0
          %537 = vmatprep.subr.mxu0 0.0
          %538 = vmatpush1.msra.mxu0 0.0
          %539 = vmatprep.subr.mxu0 0.0
          %540 = vmatpush1.msra.mxu0 0.0
          %541 = vmatprep.mubr.f32.mxu0 0.0
          %542 = vmatmul.mubr.f32.gmra.mrb[0].mxu0 %v404
          %v543 = vpop.f32.mrb[0].mxu0
          %v544 = vadd.f32 %v473, %v543
          %v545 = vpop.f32.mrb[0].mxu0
          %v546 = vadd.f32 %v475, %v545
          %547 = vdwg.mxu0
          %548 = vmatprep.subr.mxu0 %v273
          %549 = vmatpush1.msra.mxu0 %v272
          %550 = vmatprep.subr.mxu0 %v277
          %551 = vmatpush1.msra.mxu0 %v276
          %552 = vmatprep.subr.mxu0 %v281
          %553 = vmatpush1.msra.mxu0 %v280
          %554 = vmatprep.subr.mxu0 %v285
          %555 = vmatpush1.msra.mxu0 %v284
          %556 = vmatprep.subr.mxu0 %v289
          %557 = vmatpush1.msra.mxu0 %v288
          %558 = vmatprep.subr.mxu0 %v293
          %559 = vmatpush1.msra.mxu0 %v292
          %560 = vmatprep.subr.mxu0 %v297
          %561 = vmatpush1.msra.mxu0 %v296
          %562 = vmatprep.subr.mxu0 %v301
          %563 = vmatpush1.msra.mxu0 %v300
          %564 = vmatprep.subr.mxu0 %v305
          %565 = vmatpush1.msra.mxu0 %v304
          %566 = vmatprep.subr.mxu0 %v309
          %567 = vmatpush1.msra.mxu0 %v308
          %568 = vmatprep.subr.mxu0 %v313
          %569 = vmatpush1.msra.mxu0 %v312
          %570 = vmatprep.subr.mxu0 %v317
          %571 = vmatpush1.msra.mxu0 %v316
          %572 = vmatprep.subr.mxu0 %v321
          %573 = vmatpush1.msra.mxu0 %v320
          %574 = vmatprep.subr.mxu0 %v325
          %575 = vmatpush1.msra.mxu0 %v324
          %576 = vmatprep.subr.mxu0 %v329
          %577 = vmatpush1.msra.mxu0 %v328
          %578 = vmatprep.subr.mxu0 %v333
          %579 = vmatpush1.msra.mxu0 %v332
          %580 = vmatprep.subr.mxu0 %v337
          %581 = vmatpush1.msra.mxu0 %v336
          %582 = vmatprep.subr.mxu0 %v341
          %583 = vmatpush1.msra.mxu0 %v340
          %584 = vmatprep.subr.mxu0 %v345
          %585 = vmatpush1.msra.mxu0 %v344
          %586 = vmatprep.subr.mxu0 %v349
          %587 = vmatpush1.msra.mxu0 %v348
          %588 = vmatprep.subr.mxu0 %v353
          %589 = vmatpush1.msra.mxu0 %v352
          %590 = vmatprep.subr.mxu0 %v357
          %591 = vmatpush1.msra.mxu0 %v356
          %592 = vmatprep.subr.mxu0 %v361
          %593 = vmatpush1.msra.mxu0 %v360
          %594 = vmatprep.subr.mxu0 %v365
          %595 = vmatpush1.msra.mxu0 %v364
          %596 = vmatprep.subr.mxu0 %v369
          %597 = vmatpush1.msra.mxu0 %v368
          %598 = vmatprep.subr.mxu0 %v373
          %599 = vmatpush1.msra.mxu0 %v372
          %600 = vmatprep.subr.mxu0 %v377
          %601 = vmatpush1.msra.mxu0 %v376
          %602 = vmatprep.subr.mxu0 %v381
          %603 = vmatpush1.msra.mxu0 %v380
          %604 = vmatprep.subr.mxu0 %v385
          %605 = vmatpush1.msra.mxu0 %v384
          %606 = vmatprep.subr.mxu0 %v389
          %607 = vmatpush1.msra.mxu0 %v388
          %608 = vmatprep.subr.mxu0 %v393
          %609 = vmatpush1.msra.mxu0 %v392
          %610 = vmatprep.subr.mxu0 %v397
          %611 = vmatpush1.msra.mxu0 %v396
          %612 = vmatprep.mubr.f32.mxu0 %v269
          %613 = vmatmul.mubr.f32.gmra.mrb[0].mxu0 %v252
          %v614 = vpop.f32.mrb[0].mxu0
          %v615 = vadd.f32 0.0, %v614
          %v616 = vpop.f32.mrb[0].mxu0
          %v617 = vadd.f32 0.0, %v616
          %618 = vdwg.mxu0
          %619 = vmatprep.subr.mxu0 %v401
          %620 = vmatpush1.msra.mxu0 %v400
          %621 = vmatprep.subr.mxu0 0.0
          %622 = vmatpush1.msra.mxu0 0.0
          %623 = vmatprep.subr.mxu0 0.0
          %624 = vmatpush1.msra.mxu0 0.0
          %625 = vmatprep.subr.mxu0 0.0
          %626 = vmatpush1.msra.mxu0 0.0
          %627 = vmatprep.subr.mxu0 0.0
          %628 = vmatpush1.msra.mxu0 0.0
          %629 = vmatprep.subr.mxu0 0.0
          %630 = vmatpush1.msra.mxu0 0.0
          %631 = vmatprep.subr.mxu0 0.0
          %632 = vmatpush1.msra.mxu0 0.0
          %633 = vmatprep.subr.mxu0 0.0
          %634 = vmatpush1.msra.mxu0 0.0
          %635 = vmatprep.subr.mxu0 0.0
          %636 = vmatpush1.msra.mxu0 0.0
          %637 = vmatprep.subr.mxu0 0.0
          %638 = vmatpush1.msra.mxu0 0.0
          %639 = vmatprep.subr.mxu0 0.0
          %640 = vmatpush1.msra.mxu0 0.0
          %641 = vmatprep.subr.mxu0 0.0
          %642 = vmatpush1.msra.mxu0 0.0
          %643 = vmatprep.subr.mxu0 0.0
          %644 = vmatpush1.msra.mxu0 0.0
          %645 = vmatprep.subr.mxu0 0.0
          %646 = vmatpush1.msra.mxu0 0.0
          %647 = vmatprep.subr.mxu0 0.0
          %648 = vmatpush1.msra.mxu0 0.0
          %649 = vmatprep.subr.mxu0 0.0
          %650 = vmatpush1.msra.mxu0 0.0
          %651 = vmatprep.subr.mxu0 0.0
          %652 = vmatpush1.msra.mxu0 0.0
          %653 = vmatprep.subr.mxu0 0.0
          %654 = vmatpush1.msra.mxu0 0.0
          %655 = vmatprep.subr.mxu0 0.0
          %656 = vmatpush1.msra.mxu0 0.0
          %657 = vmatprep.subr.mxu0 0.0
          %658 = vmatpush1.msra.mxu0 0.0
          %659 = vmatprep.subr.mxu0 0.0
          %660 = vmatpush1.msra.mxu0 0.0
          %661 = vmatprep.subr.mxu0 0.0
          %662 = vmatpush1.msra.mxu0 0.0
          %663 = vmatprep.subr.mxu0 0.0
          %664 = vmatpush1.msra.mxu0 0.0
          %665 = vmatprep.subr.mxu0 0.0
          %666 = vmatpush1.msra.mxu0 0.0
          %667 = vmatprep.subr.mxu0 0.0
          %668 = vmatpush1.msra.mxu0 0.0
          %669 = vmatprep.subr.mxu0 0.0
          %670 = vmatpush1.msra.mxu0 0.0
          %671 = vmatprep.subr.mxu0 0.0
          %672 = vmatpush1.msra.mxu0 0.0
          %673 = vmatprep.subr.mxu0 0.0
          %674 = vmatpush1.msra.mxu0 0.0
          %675 = vmatprep.subr.mxu0 0.0
          %676 = vmatpush1.msra.mxu0 0.0
          %677 = vmatprep.subr.mxu0 0.0
          %678 = vmatpush1.msra.mxu0 0.0
          %679 = vmatprep.subr.mxu0 0.0
          %680 = vmatpush1.msra.mxu0 0.0
          %681 = vmatprep.subr.mxu0 0.0
          %682 = vmatpush1.msra.mxu0 0.0
          %683 = vmatprep.mubr.f32.mxu0 0.0
          %684 = vmatmul.mubr.f32.gmra.mrb[0].mxu0 %v404
          %v685 = vpop.f32.mrb[0].mxu0
          %v686 = vadd.f32 %v615, %v685
          %v687 = vpop.f32.mrb[0].mxu0
          %v688 = vadd.f32 %v617, %v687
          %689 = vdwg.mxu0
          %v690 = vxor.u32 %v544, 2147483648
          %v691 = vxor.u32 %v546, 2147483648
          %v692 = vxor.u32 %v686, 2147483648
          %v693 = vmul.f32 %v690, 1.442695
          %v694 = vpow.pop %v693
          %v695 = vmul.f32 %v691, 1.442695
          %v696 = vpow.pop %v695
          %v697 = vmul.f32 %v692, 1.442695
          %v698 = vpow.pop %v697
          %v699 = vadd.f32 %v694, 1.0
          %v700 = vadd.f32 %v696, 1.0
          %v701 = vadd.f32 %v698, 1.0
          %v702 = vrcp.pop %v699
          %v703 = vmul.f32 1.0, %v702
          %v704 = vrcp.pop %v700
          %v705 = vmul.f32 1.0, %v704
          %v706 = vrcp.pop %v701
          %v707 = vmul.f32 1.0, %v706
          %v708 = vtanh.pop %v688
          %v709 = vmul.f32 %v705, %v253
          %v710 = vmul.f32 %v703, %v708
          %v711 = vadd.f32 %v709, %v710
          %v712 = vtanh.pop %v711
          %v713 = vmul.f32 %v707, %v712
          %s714 = ssub.s32 %s240, 7
          %p715 = scmp.gt.s32.totalorder %s714, 0
          %s716 = scalar_select %p715, %s714, 0
          %718 = vrot.lane.b32.xlu0 %v713, 16
          %v719 = vpop.permute.xlu0 %718
          %s721 = smul.u32 %s716, 8
          %s722 = scalar_lea.vmem [#allocation2], %s721
          %723 = vst.msk [vmem:[%s722] sm:$0xff] %vm268, %v719
        $region53: #{dqn_forward_pallas.1} parent=35 // loop_footer
          %s244 = sadd.s32 1, %s240
        $region54: #{dqn_forward_pallas.1} parent=35 // loop_footer_branch
          %239 = sbr.rel target = $region50
        $region55: #{dqn_forward_pallas.1} parent=35 // loop_exit
          _
        %p724 = scmp.eq.s32.totalorder %s19, 3
        %p725 = scmp.eq.s32.totalorder %s19, 11
        %p726 = por %p724, %p725
        // Predicated region
        $region56: #{dqn_forward_pallas.1} parent=35 // pred_check
          %p727 = pneg %p726
        $region57: #{dqn_forward_pallas.1} parent=35 // pred_check_branch
          %729 = sbr.rel (%p727) target = $region59
        $region58: #{dqn_forward_pallas.1} parent=35 // pred_region
          %v730 = vld [vmem:[#allocation2] sm:$0xff]
          %v731 = vld [vmem:[#allocation2 + $0x8] sm:$0xff]
          %v732 = vld [vmem:[#allocation2 + $0x10] sm:$0xff]
          %v733 = vld [vmem:[#allocation2 + $0x18] sm:$0xff]
          %v734 = vld [vmem:[#allocation2 + $0x20] sm:$0xff]
          %v735 = vld [vmem:[#allocation2 + $0x28] sm:$0xff]
          %v736 = vld [vmem:[#allocation2 + $0x30] sm:$0xff]
          %v737 = vld [vmem:[#allocation2 + $0x38] sm:$0xff]
          %v738 = vmax.f32 %v730, 0.0
          %v739 = vmax.f32 %v731, 0.0
          %v740 = vmax.f32 %v732, 0.0
          %v741 = vmax.f32 %v733, 0.0
          %v742 = vmax.f32 %v734, 0.0
          %v743 = vmax.f32 %v735, 0.0
          %v744 = vmax.f32 %v736, 0.0
          %v745 = vmax.f32 %v737, 0.0
          %vm746 = vcmask 130048
          %747 = vst.msk [vmem:[#allocation2] sm:$0xff] %vm746, %v738
          %748 = vst.msk [vmem:[#allocation2 + $0x8] sm:$0xff] %vm746, %v739
          %749 = vst.msk [vmem:[#allocation2 + $0x10] sm:$0xff] %vm746, %v740
          %750 = vst.msk [vmem:[#allocation2 + $0x18] sm:$0xff] %vm746, %v741
          %751 = vst.msk [vmem:[#allocation2 + $0x20] sm:$0xff] %vm746, %v742
          %752 = vst.msk [vmem:[#allocation2 + $0x28] sm:$0xff] %vm746, %v743
          %753 = vst.msk [vmem:[#allocation2 + $0x30] sm:$0xff] %vm746, %v744
          %754 = vst.msk [vmem:[#allocation2 + $0x38] sm:$0xff] %vm746, %v745
        $region59: #{dqn_forward_pallas.1} parent=35 // pred_fallthru
          _
        %p755 = scmp.eq.s32.totalorder %s19, 19
        // Predicated region
        $region60: #{dqn_forward_pallas.1} parent=35 // pred_check
          %p756 = pneg %p755
        $region61: #{dqn_forward_pallas.1} parent=35 // pred_check_branch
          %758 = sbr.rel (%p756) target = $region63
        $region62: #{dqn_forward_pallas.1} parent=35 // pred_region
          %v759 = vld [vmem:[%s2] sm:$0xff]
          %v760 = vld [vmem:[%s2 + $0x8] sm:$0xff]
          %v761 = vld [vmem:[#allocation5] sm:$0x1]
          %v762 = vld [vmem:[#allocation2] sm:$0xff]
          %v763 = vmax.f32 %v762, 0.0
          %v765 = vlaneseq
          %v766 = vshrl.u32 %v765, 7
          %v767 = vsub.s32 0, %v766
          %v768 = vrot.slane %v761, %v767
          %vm770 = vcmask 130048
          %v772 = vsel %vm770, %v763, 0
          %774 = vmatprep.subr.mxu0 0.0
          %775 = vmatpush1.msra.mxu0 %v759
          %776 = vmatprep.subr.mxu0 0.0
          %777 = vmatpush1.msra.mxu0 %v760
          %778 = vmatprep.subr.mxu0 0.0
          %779 = vmatpush1.msra.mxu0 0.0
          %780 = vmatprep.subr.mxu0 0.0
          %781 = vmatpush1.msra.mxu0 0.0
          %782 = vmatprep.subr.mxu0 0.0
          %783 = vmatpush1.msra.mxu0 0.0
          %784 = vmatprep.subr.mxu0 0.0
          %785 = vmatpush1.msra.mxu0 0.0
          %786 = vmatprep.subr.mxu0 0.0
          %787 = vmatpush1.msra.mxu0 0.0
          %788 = vmatprep.subr.mxu0 0.0
          %789 = vmatpush1.msra.mxu0 0.0
          %790 = vmatprep.subr.mxu0 0.0
          %791 = vmatpush1.msra.mxu0 0.0
          %792 = vmatprep.subr.mxu0 0.0
          %793 = vmatpush1.msra.mxu0 0.0
          %794 = vmatprep.subr.mxu0 0.0
          %795 = vmatpush1.msra.mxu0 0.0
          %796 = vmatprep.subr.mxu0 0.0
          %797 = vmatpush1.msra.mxu0 0.0
          %798 = vmatprep.subr.mxu0 0.0
          %799 = vmatpush1.msra.mxu0 0.0
          %800 = vmatprep.subr.mxu0 0.0
          %801 = vmatpush1.msra.mxu0 0.0
          %802 = vmatprep.subr.mxu0 0.0
          %803 = vmatpush1.msra.mxu0 0.0
          %804 = vmatprep.subr.mxu0 0.0
          %805 = vmatpush1.msra.mxu0 0.0
          %806 = vmatprep.subr.mxu0 0.0
          %807 = vmatpush1.msra.mxu0 0.0
          %808 = vmatprep.subr.mxu0 0.0
          %809 = vmatpush1.msra.mxu0 0.0
          %810 = vmatprep.subr.mxu0 0.0
          %811 = vmatpush1.msra.mxu0 0.0
          %812 = vmatprep.subr.mxu0 0.0
          %813 = vmatpush1.msra.mxu0 0.0
          %814 = vmatprep.subr.mxu0 0.0
          %815 = vmatpush1.msra.mxu0 0.0
          %816 = vmatprep.subr.mxu0 0.0
          %817 = vmatpush1.msra.mxu0 0.0
          %818 = vmatprep.subr.mxu0 0.0
          %819 = vmatpush1.msra.mxu0 0.0
          %820 = vmatprep.subr.mxu0 0.0
          %821 = vmatpush1.msra.mxu0 0.0
          %822 = vmatprep.subr.mxu0 0.0
          %823 = vmatpush1.msra.mxu0 0.0
          %824 = vmatprep.subr.mxu0 0.0
          %825 = vmatpush1.msra.mxu0 0.0
          %826 = vmatprep.subr.mxu0 0.0
          %827 = vmatpush1.msra.mxu0 0.0
          %828 = vmatprep.subr.mxu0 0.0
          %829 = vmatpush1.msra.mxu0 0.0
          %830 = vmatprep.subr.mxu0 0.0
          %831 = vmatpush1.msra.mxu0 0.0
          %832 = vmatprep.subr.mxu0 0.0
          %833 = vmatpush1.msra.mxu0 0.0
          %834 = vmatprep.subr.mxu0 0.0
          %835 = vmatpush1.msra.mxu0 0.0
          %836 = vmatprep.subr.mxu0 0.0
          %837 = vmatpush1.msra.mxu0 0.0
          %838 = vmatprep.mubr.f32.mxu0 0.0
          %839 = vmatmul.mubr.f32.gmra.mrb[0].mxu0 %v772
          %v840 = vpop.f32.mrb[0].mxu0
          %v841 = vadd.f32 %v768, %v840
          %v842 = vpop.f32.mrb[0].mxu0
          %843 = vdwg.mxu0
          %vm844 = vcmask 31744
          %845 = vst.msk [vmem:[%s4] sm:$0xff] %vm844, %v841
          %s846 = scalar_lea.vmem [#allocation2], 8
          %v847 = vld [vmem:[%s846] sm:$0xff]
          %v848 = vmax.f32 %v847, 0.0
          %v850 = vsel %vm770, %v848, 0
          %852 = vmatprep.subr.mxu0 0.0
          %853 = vmatpush1.msra.mxu0 %v759
          %854 = vmatprep.subr.mxu0 0.0
          %855 = vmatpush1.msra.mxu0 %v760
          %856 = vmatprep.subr.mxu0 0.0
          %857 = vmatpush1.msra.mxu0 0.0
          %858 = vmatprep.subr.mxu0 0.0
          %859 = vmatpush1.msra.mxu0 0.0
          %860 = vmatprep.subr.mxu0 0.0
          %861 = vmatpush1.msra.mxu0 0.0
          %862 = vmatprep.subr.mxu0 0.0
          %863 = vmatpush1.msra.mxu0 0.0
          %864 = vmatprep.subr.mxu0 0.0
          %865 = vmatpush1.msra.mxu0 0.0
          %866 = vmatprep.subr.mxu0 0.0
          %867 = vmatpush1.msra.mxu0 0.0
          %868 = vmatprep.subr.mxu0 0.0
          %869 = vmatpush1.msra.mxu0 0.0
          %870 = vmatprep.subr.mxu0 0.0
          %871 = vmatpush1.msra.mxu0 0.0
          %872 = vmatprep.subr.mxu0 0.0
          %873 = vmatpush1.msra.mxu0 0.0
          %874 = vmatprep.subr.mxu0 0.0
          %875 = vmatpush1.msra.mxu0 0.0
          %876 = vmatprep.subr.mxu0 0.0
          %877 = vmatpush1.msra.mxu0 0.0
          %878 = vmatprep.subr.mxu0 0.0
          %879 = vmatpush1.msra.mxu0 0.0
          %880 = vmatprep.subr.mxu0 0.0
          %881 = vmatpush1.msra.mxu0 0.0
          %882 = vmatprep.subr.mxu0 0.0
          %883 = vmatpush1.msra.mxu0 0.0
          %884 = vmatprep.subr.mxu0 0.0
          %885 = vmatpush1.msra.mxu0 0.0
          %886 = vmatprep.subr.mxu0 0.0
          %887 = vmatpush1.msra.mxu0 0.0
          %888 = vmatprep.subr.mxu0 0.0
          %889 = vmatpush1.msra.mxu0 0.0
          %890 = vmatprep.subr.mxu0 0.0
          %891 = vmatpush1.msra.mxu0 0.0
          %892 = vmatprep.subr.mxu0 0.0
          %893 = vmatpush1.msra.mxu0 0.0
          %894 = vmatprep.subr.mxu0 0.0
          %895 = vmatpush1.msra.mxu0 0.0
          %896 = vmatprep.subr.mxu0 0.0
          %897 = vmatpush1.msra.mxu0 0.0
          %898 = vmatprep.subr.mxu0 0.0
          %899 = vmatpush1.msra.mxu0 0.0
          %900 = vmatprep.subr.mxu0 0.0
          %901 = vmatpush1.msra.mxu0 0.0
          %902 = vmatprep.subr.mxu0 0.0
          %903 = vmatpush1.msra.mxu0 0.0
          %904 = vmatprep.subr.mxu0 0.0
          %905 = vmatpush1.msra.mxu0 0.0
          %906 = vmatprep.subr.mxu0 0.0
          %907 = vmatpush1.msra.mxu0 0.0
          %908 = vmatprep.subr.mxu0 0.0
          %909 = vmatpush1.msra.mxu0 0.0
          %910 = vmatprep.subr.mxu0 0.0
          %911 = vmatpush1.msra.mxu0 0.0
          %912 = vmatprep.subr.mxu0 0.0
          %913 = vmatpush1.msra.mxu0 0.0
          %914 = vmatprep.subr.mxu0 0.0
          %915 = vmatpush1.msra.mxu0 0.0
          %916 = vmatprep.mubr.f32.mxu0 0.0
          %917 = vmatmul.mubr.f32.gmra.mrb[0].mxu0 %v850
          %v918 = vpop.f32.mrb[0].mxu0
          %v919 = vadd.f32 %v768, %v918
          %v920 = vpop.f32.mrb[0].mxu0
          %921 = vdwg.mxu0
          %922 = vst.msk [vmem:[%s4 + $0x8] sm:$0xff] %vm844, %v919
          %s923 = scalar_lea.vmem [#allocation2], 16
          %v924 = vld [vmem:[%s923] sm:$0xff]
          %v925 = vmax.f32 %v924, 0.0
          %v927 = vsel %vm770, %v925, 0
          %929 = vmatprep.subr.mxu0 0.0
          %930 = vmatpush1.msra.mxu0 %v759
          %931 = vmatprep.subr.mxu0 0.0
          %932 = vmatpush1.msra.mxu0 %v760
          %933 = vmatprep.subr.mxu0 0.0
          %934 = vmatpush1.msra.mxu0 0.0
          %935 = vmatprep.subr.mxu0 0.0
          %936 = vmatpush1.msra.mxu0 0.0
          %937 = vmatprep.subr.mxu0 0.0
          %938 = vmatpush1.msra.mxu0 0.0
          %939 = vmatprep.subr.mxu0 0.0
          %940 = vmatpush1.msra.mxu0 0.0
          %941 = vmatprep.subr.mxu0 0.0
          %942 = vmatpush1.msra.mxu0 0.0
          %943 = vmatprep.subr.mxu0 0.0
          %944 = vmatpush1.msra.mxu0 0.0
          %945 = vmatprep.subr.mxu0 0.0
          %946 = vmatpush1.msra.mxu0 0.0
          %947 = vmatprep.subr.mxu0 0.0
          %948 = vmatpush1.msra.mxu0 0.0
          %949 = vmatprep.subr.mxu0 0.0
          %950 = vmatpush1.msra.mxu0 0.0
          %951 = vmatprep.subr.mxu0 0.0
          %952 = vmatpush1.msra.mxu0 0.0
          %953 = vmatprep.subr.mxu0 0.0
          %954 = vmatpush1.msra.mxu0 0.0
          %955 = vmatprep.subr.mxu0 0.0
          %956 = vmatpush1.msra.mxu0 0.0
          %957 = vmatprep.subr.mxu0 0.0
          %958 = vmatpush1.msra.mxu0 0.0
          %959 = vmatprep.subr.mxu0 0.0
          %960 = vmatpush1.msra.mxu0 0.0
          %961 = vmatprep.subr.mxu0 0.0
          %962 = vmatpush1.msra.mxu0 0.0
          %963 = vmatprep.subr.mxu0 0.0
          %964 = vmatpush1.msra.mxu0 0.0
          %965 = vmatprep.subr.mxu0 0.0
          %966 = vmatpush1.msra.mxu0 0.0
          %967 = vmatprep.subr.mxu0 0.0
          %968 = vmatpush1.msra.mxu0 0.0
          %969 = vmatprep.subr.mxu0 0.0
          %970 = vmatpush1.msra.mxu0 0.0
          %971 = vmatprep.subr.mxu0 0.0
          %972 = vmatpush1.msra.mxu0 0.0
          %973 = vmatprep.subr.mxu0 0.0
          %974 = vmatpush1.msra.mxu0 0.0
          %975 = vmatprep.subr.mxu0 0.0
          %976 = vmatpush1.msra.mxu0 0.0
          %977 = vmatprep.subr.mxu0 0.0
          %978 = vmatpush1.msra.mxu0 0.0
          %979 = vmatprep.subr.mxu0 0.0
          %980 = vmatpush1.msra.mxu0 0.0
          %981 = vmatprep.subr.mxu0 0.0
          %982 = vmatpush1.msra.mxu0 0.0
          %983 = vmatprep.subr.mxu0 0.0
          %984 = vmatpush1.msra.mxu0 0.0
          %985 = vmatprep.subr.mxu0 0.0
          %986 = vmatpush1.msra.mxu0 0.0
          %987 = vmatprep.subr.mxu0 0.0
          %988 = vmatpush1.msra.mxu0 0.0
          %989 = vmatprep.subr.mxu0 0.0
          %990 = vmatpush1.msra.mxu0 0.0
          %991 = vmatprep.subr.mxu0 0.0
          %992 = vmatpush1.msra.mxu0 0.0
          %993 = vmatprep.mubr.f32.mxu0 0.0
          %994 = vmatmul.mubr.f32.gmra.mrb[0].mxu0 %v927
          %v995 = vpop.f32.mrb[0].mxu0
          %v996 = vadd.f32 %v768, %v995
          %v997 = vpop.f32.mrb[0].mxu0
          %998 = vdwg.mxu0
          %999 = vst.msk [vmem:[%s4 + $0x10] sm:$0xff] %vm844, %v996
          %s1000 = scalar_lea.vmem [#allocation2], 24
          %v1001 = vld [vmem:[%s1000] sm:$0xff]
          %v1002 = vmax.f32 %v1001, 0.0
          %v1004 = vsel %vm770, %v1002, 0
          %1006 = vmatprep.subr.mxu0 0.0
          %1007 = vmatpush1.msra.mxu0 %v759
          %1008 = vmatprep.subr.mxu0 0.0
          %1009 = vmatpush1.msra.mxu0 %v760
          %1010 = vmatprep.subr.mxu0 0.0
          %1011 = vmatpush1.msra.mxu0 0.0
          %1012 = vmatprep.subr.mxu0 0.0
          %1013 = vmatpush1.msra.mxu0 0.0
          %1014 = vmatprep.subr.mxu0 0.0
          %1015 = vmatpush1.msra.mxu0 0.0
          %1016 = vmatprep.subr.mxu0 0.0
          %1017 = vmatpush1.msra.mxu0 0.0
          %1018 = vmatprep.subr.mxu0 0.0
          %1019 = vmatpush1.msra.mxu0 0.0
          %1020 = vmatprep.subr.mxu0 0.0
          %1021 = vmatpush1.msra.mxu0 0.0
          %1022 = vmatprep.subr.mxu0 0.0
          %1023 = vmatpush1.msra.mxu0 0.0
          %1024 = vmatprep.subr.mxu0 0.0
          %1025 = vmatpush1.msra.mxu0 0.0
          %1026 = vmatprep.subr.mxu0 0.0
          %1027 = vmatpush1.msra.mxu0 0.0
          %1028 = vmatprep.subr.mxu0 0.0
          %1029 = vmatpush1.msra.mxu0 0.0
          %1030 = vmatprep.subr.mxu0 0.0
          %1031 = vmatpush1.msra.mxu0 0.0
          %1032 = vmatprep.subr.mxu0 0.0
          %1033 = vmatpush1.msra.mxu0 0.0
          %1034 = vmatprep.subr.mxu0 0.0
          %1035 = vmatpush1.msra.mxu0 0.0
          %1036 = vmatprep.subr.mxu0 0.0
          %1037 = vmatpush1.msra.mxu0 0.0
          %1038 = vmatprep.subr.mxu0 0.0
          %1039 = vmatpush1.msra.mxu0 0.0
          %1040 = vmatprep.subr.mxu0 0.0
          %1041 = vmatpush1.msra.mxu0 0.0
          %1042 = vmatprep.subr.mxu0 0.0
          %1043 = vmatpush1.msra.mxu0 0.0
          %1044 = vmatprep.subr.mxu0 0.0
          %1045 = vmatpush1.msra.mxu0 0.0
          %1046 = vmatprep.subr.mxu0 0.0
          %1047 = vmatpush1.msra.mxu0 0.0
          %1048 = vmatprep.subr.mxu0 0.0
          %1049 = vmatpush1.msra.mxu0 0.0
          %1050 = vmatprep.subr.mxu0 0.0
          %1051 = vmatpush1.msra.mxu0 0.0
          %1052 = vmatprep.subr.mxu0 0.0
          %1053 = vmatpush1.msra.mxu0 0.0
          %1054 = vmatprep.subr.mxu0 0.0
          %1055 = vmatpush1.msra.mxu0 0.0
          %1056 = vmatprep.subr.mxu0 0.0
          %1057 = vmatpush1.msra.mxu0 0.0
          %1058 = vmatprep.subr.mxu0 0.0
          %1059 = vmatpush1.msra.mxu0 0.0
          %1060 = vmatprep.subr.mxu0 0.0
          %1061 = vmatpush1.msra.mxu0 0.0
          %1062 = vmatprep.subr.mxu0 0.0
          %1063 = vmatpush1.msra.mxu0 0.0
          %1064 = vmatprep.subr.mxu0 0.0
          %1065 = vmatpush1.msra.mxu0 0.0
          %1066 = vmatprep.subr.mxu0 0.0
          %1067 = vmatpush1.msra.mxu0 0.0
          %1068 = vmatprep.subr.mxu0 0.0
          %1069 = vmatpush1.msra.mxu0 0.0
          %1070 = vmatprep.mubr.f32.mxu0 0.0
          %1071 = vmatmul.mubr.f32.gmra.mrb[0].mxu0 %v1004
          %v1072 = vpop.f32.mrb[0].mxu0
          %v1073 = vadd.f32 %v768, %v1072
          %v1074 = vpop.f32.mrb[0].mxu0
          %1075 = vdwg.mxu0
          %1076 = vst.msk [vmem:[%s4 + $0x18] sm:$0xff] %vm844, %v1073
          %s1077 = scalar_lea.vmem [#allocation2], 32
          %v1078 = vld [vmem:[%s1077] sm:$0xff]
          %v1079 = vmax.f32 %v1078, 0.0
          %v1081 = vsel %vm770, %v1079, 0
          %1083 = vmatprep.subr.mxu0 0.0
          %1084 = vmatpush1.msra.mxu0 %v759
          %1085 = vmatprep.subr.mxu0 0.0
          %1086 = vmatpush1.msra.mxu0 %v760
          %1087 = vmatprep.subr.mxu0 0.0
          %1088 = vmatpush1.msra.mxu0 0.0
          %1089 = vmatprep.subr.mxu0 0.0
          %1090 = vmatpush1.msra.mxu0 0.0
          %1091 = vmatprep.subr.mxu0 0.0
          %1092 = vmatpush1.msra.mxu0 0.0
          %1093 = vmatprep.subr.mxu0 0.0
          %1094 = vmatpush1.msra.mxu0 0.0
          %1095 = vmatprep.subr.mxu0 0.0
          %1096 = vmatpush1.msra.mxu0 0.0
          %1097 = vmatprep.subr.mxu0 0.0
          %1098 = vmatpush1.msra.mxu0 0.0
          %1099 = vmatprep.subr.mxu0 0.0
          %1100 = vmatpush1.msra.mxu0 0.0
          %1101 = vmatprep.subr.mxu0 0.0
          %1102 = vmatpush1.msra.mxu0 0.0
          %1103 = vmatprep.subr.mxu0 0.0
          %1104 = vmatpush1.msra.mxu0 0.0
          %1105 = vmatprep.subr.mxu0 0.0
          %1106 = vmatpush1.msra.mxu0 0.0
          %1107 = vmatprep.subr.mxu0 0.0
          %1108 = vmatpush1.msra.mxu0 0.0
          %1109 = vmatprep.subr.mxu0 0.0
          %1110 = vmatpush1.msra.mxu0 0.0
          %1111 = vmatprep.subr.mxu0 0.0
          %1112 = vmatpush1.msra.mxu0 0.0
          %1113 = vmatprep.subr.mxu0 0.0
          %1114 = vmatpush1.msra.mxu0 0.0
          %1115 = vmatprep.subr.mxu0 0.0
          %1116 = vmatpush1.msra.mxu0 0.0
          %1117 = vmatprep.subr.mxu0 0.0
          %1118 = vmatpush1.msra.mxu0 0.0
          %1119 = vmatprep.subr.mxu0 0.0
          %1120 = vmatpush1.msra.mxu0 0.0
          %1121 = vmatprep.subr.mxu0 0.0
          %1122 = vmatpush1.msra.mxu0 0.0
          %1123 = vmatprep.subr.mxu0 0.0
          %1124 = vmatpush1.msra.mxu0 0.0
          %1125 = vmatprep.subr.mxu0 0.0
          %1126 = vmatpush1.msra.mxu0 0.0
          %1127 = vmatprep.subr.mxu0 0.0
          %1128 = vmatpush1.msra.mxu0 0.0
          %1129 = vmatprep.subr.mxu0 0.0
          %1130 = vmatpush1.msra.mxu0 0.0
          %1131 = vmatprep.subr.mxu0 0.0
          %1132 = vmatpush1.msra.mxu0 0.0
          %1133 = vmatprep.subr.mxu0 0.0
          %1134 = vmatpush1.msra.mxu0 0.0
          %1135 = vmatprep.subr.mxu0 0.0
          %1136 = vmatpush1.msra.mxu0 0.0
          %1137 = vmatprep.subr.mxu0 0.0
          %1138 = vmatpush1.msra.mxu0 0.0
          %1139 = vmatprep.subr.mxu0 0.0
          %1140 = vmatpush1.msra.mxu0 0.0
          %1141 = vmatprep.subr.mxu0 0.0
          %1142 = vmatpush1.msra.mxu0 0.0
          %1143 = vmatprep.subr.mxu0 0.0
          %1144 = vmatpush1.msra.mxu0 0.0
          %1145 = vmatprep.subr.mxu0 0.0
          %1146 = vmatpush1.msra.mxu0 0.0
          %1147 = vmatprep.mubr.f32.mxu0 0.0
          %1148 = vmatmul.mubr.f32.gmra.mrb[0].mxu0 %v1081
          %v1149 = vpop.f32.mrb[0].mxu0
          %v1150 = vadd.f32 %v768, %v1149
          %v1151 = vpop.f32.mrb[0].mxu0
          %1152 = vdwg.mxu0
          %1153 = vst.msk [vmem:[%s4 + $0x20] sm:$0xff] %vm844, %v1150
          %s1154 = scalar_lea.vmem [#allocation2], 40
          %v1155 = vld [vmem:[%s1154] sm:$0xff]
          %v1156 = vmax.f32 %v1155, 0.0
          %v1158 = vsel %vm770, %v1156, 0
          %1160 = vmatprep.subr.mxu0 0.0
          %1161 = vmatpush1.msra.mxu0 %v759
          %1162 = vmatprep.subr.mxu0 0.0
          %1163 = vmatpush1.msra.mxu0 %v760
          %1164 = vmatprep.subr.mxu0 0.0
          %1165 = vmatpush1.msra.mxu0 0.0
          %1166 = vmatprep.subr.mxu0 0.0
          %1167 = vmatpush1.msra.mxu0 0.0
          %1168 = vmatprep.subr.mxu0 0.0
          %1169 = vmatpush1.msra.mxu0 0.0
          %1170 = vmatprep.subr.mxu0 0.0
          %1171 = vmatpush1.msra.mxu0 0.0
          %1172 = vmatprep.subr.mxu0 0.0
          %1173 = vmatpush1.msra.mxu0 0.0
          %1174 = vmatprep.subr.mxu0 0.0
          %1175 = vmatpush1.msra.mxu0 0.0
          %1176 = vmatprep.subr.mxu0 0.0
          %1177 = vmatpush1.msra.mxu0 0.0
          %1178 = vmatprep.subr.mxu0 0.0
          %1179 = vmatpush1.msra.mxu0 0.0
          %1180 = vmatprep.subr.mxu0 0.0
          %1181 = vmatpush1.msra.mxu0 0.0
          %1182 = vmatprep.subr.mxu0 0.0
          %1183 = vmatpush1.msra.mxu0 0.0
          %1184 = vmatprep.subr.mxu0 0.0
          %1185 = vmatpush1.msra.mxu0 0.0
          %1186 = vmatprep.subr.mxu0 0.0
          %1187 = vmatpush1.msra.mxu0 0.0
          %1188 = vmatprep.subr.mxu0 0.0
          %1189 = vmatpush1.msra.mxu0 0.0
          %1190 = vmatprep.subr.mxu0 0.0
          %1191 = vmatpush1.msra.mxu0 0.0
          %1192 = vmatprep.subr.mxu0 0.0
          %1193 = vmatpush1.msra.mxu0 0.0
          %1194 = vmatprep.subr.mxu0 0.0
          %1195 = vmatpush1.msra.mxu0 0.0
          %1196 = vmatprep.subr.mxu0 0.0
          %1197 = vmatpush1.msra.mxu0 0.0
          %1198 = vmatprep.subr.mxu0 0.0
          %1199 = vmatpush1.msra.mxu0 0.0
          %1200 = vmatprep.subr.mxu0 0.0
          %1201 = vmatpush1.msra.mxu0 0.0
          %1202 = vmatprep.subr.mxu0 0.0
          %1203 = vmatpush1.msra.mxu0 0.0
          %1204 = vmatprep.subr.mxu0 0.0
          %1205 = vmatpush1.msra.mxu0 0.0
          %1206 = vmatprep.subr.mxu0 0.0
          %1207 = vmatpush1.msra.mxu0 0.0
          %1208 = vmatprep.subr.mxu0 0.0
          %1209 = vmatpush1.msra.mxu0 0.0
          %1210 = vmatprep.subr.mxu0 0.0
          %1211 = vmatpush1.msra.mxu0 0.0
          %1212 = vmatprep.subr.mxu0 0.0
          %1213 = vmatpush1.msra.mxu0 0.0
          %1214 = vmatprep.subr.mxu0 0.0
          %1215 = vmatpush1.msra.mxu0 0.0
          %1216 = vmatprep.subr.mxu0 0.0
          %1217 = vmatpush1.msra.mxu0 0.0
          %1218 = vmatprep.subr.mxu0 0.0
          %1219 = vmatpush1.msra.mxu0 0.0
          %1220 = vmatprep.subr.mxu0 0.0
          %1221 = vmatpush1.msra.mxu0 0.0
          %1222 = vmatprep.subr.mxu0 0.0
          %1223 = vmatpush1.msra.mxu0 0.0
          %1224 = vmatprep.mubr.f32.mxu0 0.0
          %1225 = vmatmul.mubr.f32.gmra.mrb[0].mxu0 %v1158
          %v1226 = vpop.f32.mrb[0].mxu0
          %v1227 = vadd.f32 %v768, %v1226
          %v1228 = vpop.f32.mrb[0].mxu0
          %1229 = vdwg.mxu0
          %1230 = vst.msk [vmem:[%s4 + $0x28] sm:$0xff] %vm844, %v1227
          %s1231 = scalar_lea.vmem [#allocation2], 48
          %v1232 = vld [vmem:[%s1231] sm:$0xff]
          %v1233 = vmax.f32 %v1232, 0.0
          %v1235 = vsel %vm770, %v1233, 0
          %1237 = vmatprep.subr.mxu0 0.0
          %1238 = vmatpush1.msra.mxu0 %v759
          %1239 = vmatprep.subr.mxu0 0.0
          %1240 = vmatpush1.msra.mxu0 %v760
          %1241 = vmatprep.subr.mxu0 0.0
          %1242 = vmatpush1.msra.mxu0 0.0
          %1243 = vmatprep.subr.mxu0 0.0
          %1244 = vmatpush1.msra.mxu0 0.0
          %1245 = vmatprep.subr.mxu0 0.0
          %1246 = vmatpush1.msra.mxu0 0.0
          %1247 = vmatprep.subr.mxu0 0.0
          %1248 = vmatpush1.msra.mxu0 0.0
          %1249 = vmatprep.subr.mxu0 0.0
          %1250 = vmatpush1.msra.mxu0 0.0
          %1251 = vmatprep.subr.mxu0 0.0
          %1252 = vmatpush1.msra.mxu0 0.0
          %1253 = vmatprep.subr.mxu0 0.0
          %1254 = vmatpush1.msra.mxu0 0.0
          %1255 = vmatprep.subr.mxu0 0.0
          %1256 = vmatpush1.msra.mxu0 0.0
          %1257 = vmatprep.subr.mxu0 0.0
          %1258 = vmatpush1.msra.mxu0 0.0
          %1259 = vmatprep.subr.mxu0 0.0
          %1260 = vmatpush1.msra.mxu0 0.0
          %1261 = vmatprep.subr.mxu0 0.0
          %1262 = vmatpush1.msra.mxu0 0.0
          %1263 = vmatprep.subr.mxu0 0.0
          %1264 = vmatpush1.msra.mxu0 0.0
          %1265 = vmatprep.subr.mxu0 0.0
          %1266 = vmatpush1.msra.mxu0 0.0
          %1267 = vmatprep.subr.mxu0 0.0
          %1268 = vmatpush1.msra.mxu0 0.0
          %1269 = vmatprep.subr.mxu0 0.0
          %1270 = vmatpush1.msra.mxu0 0.0
          %1271 = vmatprep.subr.mxu0 0.0
          %1272 = vmatpush1.msra.mxu0 0.0
          %1273 = vmatprep.subr.mxu0 0.0
          %1274 = vmatpush1.msra.mxu0 0.0
          %1275 = vmatprep.subr.mxu0 0.0
          %1276 = vmatpush1.msra.mxu0 0.0
          %1277 = vmatprep.subr.mxu0 0.0
          %1278 = vmatpush1.msra.mxu0 0.0
          %1279 = vmatprep.subr.mxu0 0.0
          %1280 = vmatpush1.msra.mxu0 0.0
          %1281 = vmatprep.subr.mxu0 0.0
          %1282 = vmatpush1.msra.mxu0 0.0
          %1283 = vmatprep.subr.mxu0 0.0
          %1284 = vmatpush1.msra.mxu0 0.0
          %1285 = vmatprep.subr.mxu0 0.0
          %1286 = vmatpush1.msra.mxu0 0.0
          %1287 = vmatprep.subr.mxu0 0.0
          %1288 = vmatpush1.msra.mxu0 0.0
          %1289 = vmatprep.subr.mxu0 0.0
          %1290 = vmatpush1.msra.mxu0 0.0
          %1291 = vmatprep.subr.mxu0 0.0
          %1292 = vmatpush1.msra.mxu0 0.0
          %1293 = vmatprep.subr.mxu0 0.0
          %1294 = vmatpush1.msra.mxu0 0.0
          %1295 = vmatprep.subr.mxu0 0.0
          %1296 = vmatpush1.msra.mxu0 0.0
          %1297 = vmatprep.subr.mxu0 0.0
          %1298 = vmatpush1.msra.mxu0 0.0
          %1299 = vmatprep.subr.mxu0 0.0
          %1300 = vmatpush1.msra.mxu0 0.0
          %1301 = vmatprep.mubr.f32.mxu0 0.0
          %1302 = vmatmul.mubr.f32.gmra.mrb[0].mxu0 %v1235
          %v1303 = vpop.f32.mrb[0].mxu0
          %v1304 = vadd.f32 %v768, %v1303
          %v1305 = vpop.f32.mrb[0].mxu0
          %1306 = vdwg.mxu0
          %1307 = vst.msk [vmem:[%s4 + $0x30] sm:$0xff] %vm844, %v1304
          %s1308 = scalar_lea.vmem [#allocation2], 56
          %v1309 = vld [vmem:[%s1308] sm:$0xff]
          %v1310 = vmax.f32 %v1309, 0.0
          %v1312 = vsel %vm770, %v1310, 0
          %1314 = vmatprep.subr.mxu0 0.0
          %1315 = vmatpush1.msra.mxu0 %v759
          %1316 = vmatprep.subr.mxu0 0.0
          %1317 = vmatpush1.msra.mxu0 %v760
          %1318 = vmatprep.subr.mxu0 0.0
          %1319 = vmatpush1.msra.mxu0 0.0
          %1320 = vmatprep.subr.mxu0 0.0
          %1321 = vmatpush1.msra.mxu0 0.0
          %1322 = vmatprep.subr.mxu0 0.0
          %1323 = vmatpush1.msra.mxu0 0.0
          %1324 = vmatprep.subr.mxu0 0.0
          %1325 = vmatpush1.msra.mxu0 0.0
          %1326 = vmatprep.subr.mxu0 0.0
          %1327 = vmatpush1.msra.mxu0 0.0
          %1328 = vmatprep.subr.mxu0 0.0
          %1329 = vmatpush1.msra.mxu0 0.0
          %1330 = vmatprep.subr.mxu0 0.0
          %1331 = vmatpush1.msra.mxu0 0.0
          %1332 = vmatprep.subr.mxu0 0.0
          %1333 = vmatpush1.msra.mxu0 0.0
          %1334 = vmatprep.subr.mxu0 0.0
          %1335 = vmatpush1.msra.mxu0 0.0
          %1336 = vmatprep.subr.mxu0 0.0
          %1337 = vmatpush1.msra.mxu0 0.0
          %1338 = vmatprep.subr.mxu0 0.0
          %1339 = vmatpush1.msra.mxu0 0.0
          %1340 = vmatprep.subr.mxu0 0.0
          %1341 = vmatpush1.msra.mxu0 0.0
          %1342 = vmatprep.subr.mxu0 0.0
          %1343 = vmatpush1.msra.mxu0 0.0
          %1344 = vmatprep.subr.mxu0 0.0
          %1345 = vmatpush1.msra.mxu0 0.0
          %1346 = vmatprep.subr.mxu0 0.0
          %1347 = vmatpush1.msra.mxu0 0.0
          %1348 = vmatprep.subr.mxu0 0.0
          %1349 = vmatpush1.msra.mxu0 0.0
          %1350 = vmatprep.subr.mxu0 0.0
          %1351 = vmatpush1.msra.mxu0 0.0
          %1352 = vmatprep.subr.mxu0 0.0
          %1353 = vmatpush1.msra.mxu0 0.0
          %1354 = vmatprep.subr.mxu0 0.0
          %1355 = vmatpush1.msra.mxu0 0.0
          %1356 = vmatprep.subr.mxu0 0.0
          %1357 = vmatpush1.msra.mxu0 0.0
          %1358 = vmatprep.subr.mxu0 0.0
          %1359 = vmatpush1.msra.mxu0 0.0
          %1360 = vmatprep.subr.mxu0 0.0
          %1361 = vmatpush1.msra.mxu0 0.0
          %1362 = vmatprep.subr.mxu0 0.0
          %1363 = vmatpush1.msra.mxu0 0.0
          %1364 = vmatprep.subr.mxu0 0.0
          %1365 = vmatpush1.msra.mxu0 0.0
          %1366 = vmatprep.subr.mxu0 0.0
          %1367 = vmatpush1.msra.mxu0 0.0
          %1368 = vmatprep.subr.mxu0 0.0
          %1369 = vmatpush1.msra.mxu0 0.0
          %1370 = vmatprep.subr.mxu0 0.0
          %1371 = vmatpush1.msra.mxu0 0.0
          %1372 = vmatprep.subr.mxu0 0.0
          %1373 = vmatpush1.msra.mxu0 0.0
          %1374 = vmatprep.subr.mxu0 0.0
          %1375 = vmatpush1.msra.mxu0 0.0
          %1376 = vmatprep.subr.mxu0 0.0
          %1377 = vmatpush1.msra.mxu0 0.0
          %1378 = vmatprep.mubr.f32.mxu0 0.0
          %1379 = vmatmul.mubr.f32.gmra.mrb[0].mxu0 %v1312
          %v1380 = vpop.f32.mrb[0].mxu0
          %v1381 = vadd.f32 %v768, %v1380
          %v1382 = vpop.f32.mrb[0].mxu0
          %1383 = vdwg.mxu0
          %1384 = vst.msk [vmem:[%s4 + $0x38] sm:$0xff] %vm844, %v1381
        $region63: #{dqn_forward_pallas.1} parent=35 // pred_fallthru
          _
        // Predicated region
        $region64: #{dqn_forward_pallas.1} parent=35 // pred_check
          %p1385 = pneg %p121
        $region65: #{dqn_forward_pallas.1} parent=35 // pred_check_branch
          %1387 = sbr.rel (%p1385) target = $region67
        $region66: #{dqn_forward_pallas.1} parent=35 // pred_region
          _
        $region67: #{dqn_forward_pallas.1} parent=35 // pred_fallthru
          _
        // Predicated region
        $region68: #{dqn_forward_pallas.1} parent=35 // pred_check
          %p1388 = pneg %p121
        $region69: #{dqn_forward_pallas.1} parent=35 // pred_check_branch
          %1390 = sbr.rel (%p1388) target = $region71
        $region70: #{dqn_forward_pallas.1} parent=35 // pred_region
          _
        $region71: #{dqn_forward_pallas.1} parent=35 // pred_fallthru
          _
      $region36: #{dqn_forward_pallas.1} parent=5 // pred_fallthru
        _
      %p1391 = scmp.le.s32.totalorder 2, %s14
      // Predicated region
      $region72: #{dqn_forward_pallas.1} parent=5 // pred_check
        %p1392 = pneg %p1391
      $region73: #{dqn_forward_pallas.1} parent=5 // pred_check_branch
        %1394 = sbr.rel (%p1392) target = $region75
      $region74: #{dqn_forward_pallas.1} parent=5 // pred_region
        %s1395 = ssub.s32 %s14, 2
      $region75: #{dqn_forward_pallas.1} parent=5 // pred_fallthru
        _
    $region6: #{dqn_forward_pallas.1} parent=1 // loop_footer
      %s18 = sadd.s32 1, %s14
    $region7: #{dqn_forward_pallas.1} parent=1 // loop_footer_branch
      %13 = sbr.rel target = $region3
    $region8: #{dqn_forward_pallas.1} parent=1 // loop_exit
      _
    %1396 = vsyncpa [#allocation4], 1
    %s1397 = scalar_lea.sflag [#allocation4], 1
    %1398 = vsyncpa %s1397, 1
    %1399 = vsyncpa [#allocation6], 1

</llo_original>
